<compile_context>
chip_gen: v6e
topology: v6e:2x2x1
jax: 0.10.0
libtpu: 0.0.40
codegen_flags: <defaults>
</compile_context>

<pallas_src>
import functools

import jax
import jax.numpy as jnp
from jax.experimental import pallas as pl
from jax.experimental.pallas import tpu as pltpu

EPS = 1e-5
DIL = 4  # conv2: dilation == padding == 4  ->  spatial size preserved


def bypass_kernel(x_ref, w1_ref, w2a_ref, w2b_ref, w2c_ref, w3_ref,
                  rb_ref, bb_ref, rc_ref, bc_ref,
                  g1_ref, b1_ref, g2_ref, b2_ref, g3_ref, b3_ref,
                  o_ref, *, n, h, w, cb):
    r = n * h
    lb = w * cb
    inv_p = 1.0 / float(n * h * w)

    def bn(t, rmat_ref, bmat_ref, g_ref, b_ref):
        # Single-pass BatchNorm2d (training mode, biased variance); all stats in f32.
        # Channel totals are gathered across the W lane-groups with a skinny (L, C)
        # reduce matmul and scattered back with its (C, L) transpose, so no dense
        # (L, L) broadcast matrix and no narrow (1, C) intermediates appear.
        # TODO(synk): running_mean/running_var (momentum=0.1) are not tracked here.
        s = jnp.concatenate([jnp.sum(t, axis=0, keepdims=True),
                             jnp.sum(t * t, axis=0, keepdims=True)], axis=0)
        s_c = jnp.dot(s, rmat_ref[...], preferred_element_type=jnp.float32)    # (2, C)
        s_l = jnp.dot(s_c, bmat_ref[...], preferred_element_type=jnp.float32)  # (2, L)
        mean = s_l[0:1, :] * inv_p
        var = s_l[1:2, :] * inv_p - mean * mean
        # TODO(synk): E[x^2]-mean^2 can cancel badly if |mean| >> std; use a two-pass
        # or Welford form if inputs can have large means.
        scale = g_ref[...] * jax.lax.rsqrt(var + EPS)
        return t * scale + (b_ref[...] - mean * scale)

    # conv1 (1x1): one lane-dense bf16 MXU matmul with block-diagonal weight; bn1.
    a1 = jnp.dot(x_ref[...], w1_ref[...], preferred_element_type=jnp.float32)
    y1 = bn(a1, rb_ref, bb_ref, g1_ref, b1_ref)                      # f32 (R, Lb)

    # conv2 (3x3, dilation 4, padding 4): the kj (W-axis) taps and the W-side zero
    # padding live inside the three weight blocks; the three ki (H-axis) taps are
    # XLU row-rolls + an iota row mask (H-side padding), accumulated over three
    # bf16 matmuls.  No im2col concatenate, no zero-halo VMEM copies.
    hpos = jax.lax.broadcasted_iota(jnp.int32, (n, h, lb), 1).reshape(r, lb)
    y1b = y1.astype(jnp.bfloat16)
    tap_m = jnp.where(hpos >= DIL,
                      pltpu.roll(y1, DIL, axis=0), 0.0).astype(jnp.bfloat16)
    tap_p = jnp.where(hpos < h - DIL,
                      pltpu.roll(y1, r - DIL, axis=0), 0.0).astype(jnp.bfloat16)
    a2 = jnp.dot(tap_m, w2a_ref[...], preferred_element_type=jnp.float32)
    a2 = a2 + jnp.dot(y1b, w2b_ref[...], preferred_element_type=jnp.float32)
    a2 = a2 + jnp.dot(tap_p, w2c_ref[...], preferred_element_type=jnp.float32)
    y2 = bn(a2, rb_ref, bb_ref, g2_ref, b2_ref)                      # f32 (R, Lb)

    # conv3 (1x1) on the residual sum, then bn3; output stays lane-dense f32.
    a3 = jnp.dot((y1 + y2).astype(jnp.bfloat16), w3_ref[...],
                 preferred_element_type=jnp.float32)
    o_ref[...] = bn(a3, rc_ref, bc_ref, g3_ref, b3_ref)              # (R, W*C)


@jax.jit
def bypass_forward(x_nchw, params):
    """NCHW in / NCHW out (PyTorch interface); single lane-dense pallas_call."""
    w1, g1, b1, w2, g2, b2, w3, g3, b3 = params
    n, c, h, w = x_nchw.shape
    cb = w1.shape[1]
    r, lb, lc = n * h, w * cb, w * c

    # NCHW -> NHWC -> W-packed (N*H, W*C); bf16 cast fuses into the same relayout
    # and halves the activation DMA into the kernel.
    # TODO(synk): in a multi-layer network keep activations in this packed layout
    # across layers so the NCHW<->packed relayout is paid once, not per layer.
    x2d = jnp.transpose(x_nchw, (0, 2, 3, 1)).reshape(r, lc).astype(jnp.bfloat16)

    # --- all weight shaping hoisted out of the kernel (bf16 for the MXU) ----------
    eye_w = jnp.eye(w, dtype=jnp.float32)
    w1big = jnp.kron(eye_w, w1).astype(jnp.bfloat16)               # (Lc, Lb)
    w3big = jnp.kron(eye_w, w3).astype(jnp.bfloat16)               # (Lb, Lc)
    # conv2: fold kj (W-axis) taps + zero padding into shifted block-diagonal
    # blocks, one block per ki (H-axis) tap.
    w2a, w2b, w2c = [
        sum(jnp.kron(jnp.eye(w, k=(1 - kj) * DIL, dtype=jnp.float32), w2[ki, kj])
            for kj in range(3)).astype(jnp.bfloat16)
        for ki in range(3)]                                         # each (Lb, Lb)

    # Skinny BN channel reduce / broadcast matrices (kept f32: stats math stays f32).
    ones_col = jnp.ones((w, 1), jnp.float32)
    rmat_b = jnp.kron(ones_col, jnp.eye(cb, dtype=jnp.float32))    # (Lb, Cb)
    rmat_c = jnp.kron(ones_col, jnp.eye(c, dtype=jnp.float32))     # (Lc, C)
    bmat_b, bmat_c = rmat_b.T, rmat_c.T                            # (Cb, Lb), (C, Lc)

    def lane_tile(v):  # (1, C) -> (1, W*C): per-lane gamma/beta
        return jnp.tile(v.reshape(1, -1), (1, w))

    g1l, b1l = lane_tile(g1), lane_tile(b1)
    g2l, b2l = lane_tile(g2), lane_tile(b2)
    g3l, b3l = lane_tile(g3), lane_tile(b3)

    args = (x2d, w1big, w2a, w2b, w2c, w3big, rmat_b, bmat_b, rmat_c, bmat_c,
            g1l, b1l, g2l, b2l, g3l, b3l)

    kernel = functools.partial(bypass_kernel, n=n, h=h, w=w, cb=cb)
    vmem = pl.BlockSpec(memory_space=pltpu.MemorySpace.VMEM)
    out = pl.pallas_call(
        kernel,
        out_shape=jax.ShapeDtypeStruct((r, lc), jnp.float32),
        in_specs=[vmem] * len(args),
        out_specs=vmem,
        compiler_params=pltpu.CompilerParams(
            # <1 MiB of operands at test shapes; state the budget explicitly so
            # scaling up fails loudly (v5e default scoped limit 16 MiB, v7x
            # physical VMEM 64 MiB).
            vmem_limit_bytes=32 * 1024 * 1024),
    )(*args)

    return jnp.transpose(out.reshape(n, h, w, c), (0, 3, 1, 2))


def reference(x_nchw, params):
    """Pure-JAX f32 reference with the same math (training-mode BN)."""
    w1, g1, b1, w2, g2, b2, w3, g3, b3 = params
    x = jnp.transpose(x_nchw, (0, 2, 3, 1))  # NHWC

    def conv1x1(t, wm):
        return jnp.einsum('nhwc,cd->nhwd', t, wm)

    def bn(t, g, b):
        mean = t.mean(axis=(0, 1, 2), keepdims=True)
        var = ((t - mean) ** 2).mean(axis=(0, 1, 2), keepdims=True)
        return ((t - mean) * jax.lax.rsqrt(var + EPS)
                * g.reshape(1, 1, 1, -1) + b.reshape(1, 1, 1, -1))

    h1 = bn(conv1x1(x, w1), g1, b1)
    h2 = jax.lax.conv_general_dilated(
        h1, w2, window_strides=(1, 1), padding=((DIL, DIL), (DIL, DIL)),
        rhs_dilation=(DIL, DIL), dimension_numbers=('NHWC', 'HWIO', 'NHWC'))
    h2 = bn(h2, g2, b2)
    h3 = bn(conv1x1(h1 + h2, w3), g3, b3)
    return jnp.transpose(h3, (0, 3, 1, 2))


if __name__ == "__main__":
    # Small shapes consistent with the module: channels >= 16 -> bn_channels = C // 4.
    C = 32
    CB = C // 4
    N, H, W = 2, 16, 16

    key = jax.random.PRNGKey(0)
    k = jax.random.split(key, 10)

    # Same logical shapes as the PyTorch module; 1x1 conv weights as (Cin, Cout),
    # 3x3 conv weight as HWIO.  BN affine params mildly randomized to exercise them.
    w1 = jax.random.normal(k[0], (C, CB), jnp.float32) * (C ** -0.5)
    w2 = jax.random.normal(k[1], (3, 3, CB, CB), jnp.float32) * ((9 * CB) ** -0.5)
    w3 = jax.random.normal(k[2], (CB, C), jnp.float32) * (CB ** -0.5)
    g1 = 1.0 + 0.1 * jax.random.normal(k[4], (1, CB), jnp.float32)
    b1 = 0.1 * jax.random.normal(k[5], (1, CB), jnp.float32)
    g2 = 1.0 + 0.1 * jax.random.normal(k[6], (1, CB), jnp.float32)
    b2 = 0.1 * jax.random.normal(k[7], (1, CB), jnp.float32)
    g3 = 1.0 + 0.1 * jax.random.normal(k[8], (1, C), jnp.float32)
    b3 = 0.1 * jax.random.normal(k[9], (1, C), jnp.float32)
    params = (w1, g1, b1, w2, g2, b2, w3, g3, b3)

    x = jax.random.normal(k[3], (N, C, H, W), jnp.float32)

    out = jax.block_until_ready(bypass_forward(x, params))
    ref = jax.block_until_ready(reference(x, params))

    assert out.shape == (N, C, H, W)
    # bf16 MXU operands vs. the f32 reference: post-BN activations are ~unit scale and
    # bf16 relative rounding is ~2^-8, compounded over three conv/BN stages -> allow a
    # few 1e-2 of slack (still far below any logic-error magnitude).
    if not jnp.allclose(out, ref, rtol=5e-2, atol=5e-2):
        raise AssertionError(
            "mismatch vs reference, max abs err = %e"
            % float(jnp.max(jnp.abs(out - ref))))

    print("KERNEL_OK")
</pallas_src>

<mosaic_0001>
module attributes {stable_mosaic.version = 11 : i64} {
  func.func @bypass_kernel(%arg0: memref<32x512xbf16, #tpu.memory_space<vmem>>, %arg1: memref<512x128xbf16, #tpu.memory_space<vmem>>, %arg2: memref<128x128xbf16, #tpu.memory_space<vmem>>, %arg3: memref<128x128xbf16, #tpu.memory_space<vmem>>, %arg4: memref<128x128xbf16, #tpu.memory_space<vmem>>, %arg5: memref<128x512xbf16, #tpu.memory_space<vmem>>, %arg6: memref<128x8xf32, #tpu.memory_space<vmem>>, %arg7: memref<8x128xf32, #tpu.memory_space<vmem>>, %arg8: memref<512x32xf32, #tpu.memory_space<vmem>>, %arg9: memref<32x512xf32, #tpu.memory_space<vmem>>, %arg10: memref<1x128xf32, #tpu.memory_space<vmem>>, %arg11: memref<1x128xf32, #tpu.memory_space<vmem>>, %arg12: memref<1x128xf32, #tpu.memory_space<vmem>>, %arg13: memref<1x128xf32, #tpu.memory_space<vmem>>, %arg14: memref<1x512xf32, #tpu.memory_space<vmem>>, %arg15: memref<1x512xf32, #tpu.memory_space<vmem>>, %arg16: memref<32x512xf32, #tpu.memory_space<vmem>>) attributes {dimension_semantics = [], scalar_prefetch = 0 : i64, scratch_operands = 0 : i64, tpu.core_type = #tpu.core_type<tc>} {
    %c0 = arith.constant 0 : index
    %c0_0 = arith.constant 0 : index
    %0 = vector.load %arg0[%c0, %c0_0] : memref<32x512xbf16, #tpu.memory_space<vmem>>, vector<32x512xbf16>
    %c0_1 = arith.constant 0 : index
    %c0_2 = arith.constant 0 : index
    %1 = vector.load %arg1[%c0_1, %c0_2] : memref<512x128xbf16, #tpu.memory_space<vmem>>, vector<512x128xbf16>
    %cst = arith.constant dense<0.000000e+00> : vector<32x128xf32>
    %2 = tpu.matmul %0, %1, %cst {dimension_numbers = #tpu.dot_dimension_numbers<[1], [0], [0], [1], [0, 0, 1, 1], [], []>} : vector<32x512xbf16>, vector<512x128xbf16>, vector<32x128xf32> -> vector<32x128xf32>
    %cst_3 = arith.constant dense<0.000000e+00> : vector<128xf32>
    %3 = vector.multi_reduction <add>, %2, %cst_3 [0] : vector<32x128xf32> to vector<128xf32>
    %4 = vector.shape_cast %3 : vector<128xf32> to vector<1x128xf32>
    %5 = arith.mulf %2, %2 : vector<32x128xf32>
    %cst_4 = arith.constant dense<0.000000e+00> : vector<128xf32>
    %6 = vector.multi_reduction <add>, %5, %cst_4 [0] : vector<32x128xf32> to vector<128xf32>
    %7 = vector.shape_cast %6 : vector<128xf32> to vector<1x128xf32>
    %8 = tpu.concatenate %4, %7 in 0 : vector<1x128xf32>, vector<1x128xf32> -> vector<2x128xf32>
    %c0_5 = arith.constant 0 : index
    %c0_6 = arith.constant 0 : index
    %9 = vector.load %arg6[%c0_5, %c0_6] : memref<128x8xf32, #tpu.memory_space<vmem>>, vector<128x8xf32>
    %cst_7 = arith.constant dense<0.000000e+00> : vector<2x8xf32>
    %10 = tpu.matmul %8, %9, %cst_7 {dimension_numbers = #tpu.dot_dimension_numbers<[1], [0], [0], [1], [0, 0, 1, 1], [], []>} : vector<2x128xf32>, vector<128x8xf32>, vector<2x8xf32> -> vector<2x8xf32>
    %c0_8 = arith.constant 0 : index
    %c0_9 = arith.constant 0 : index
    %11 = vector.load %arg7[%c0_8, %c0_9] : memref<8x128xf32, #tpu.memory_space<vmem>>, vector<8x128xf32>
    %cst_10 = arith.constant dense<0.000000e+00> : vector<2x128xf32>
    %12 = tpu.matmul %10, %11, %cst_10 {dimension_numbers = #tpu.dot_dimension_numbers<[1], [0], [0], [1], [0, 0, 1, 1], [], []>} : vector<2x8xf32>, vector<8x128xf32>, vector<2x128xf32> -> vector<2x128xf32>
    %13 = vector.extract_strided_slice %12 {offsets = [0, 0], sizes = [1, 128], strides = [1, 1]} : vector<2x128xf32> to vector<1x128xf32>
    %cst_11 = arith.constant 0.001953125 : f32
    %14 = vector.broadcast %cst_11 : f32 to vector<1x128xf32>
    %15 = arith.mulf %13, %14 : vector<1x128xf32>
    %16 = vector.extract_strided_slice %12 {offsets = [1, 0], sizes = [1, 128], strides = [1, 1]} : vector<2x128xf32> to vector<1x128xf32>
    %cst_12 = arith.constant 0.001953125 : f32
    %17 = vector.broadcast %cst_12 : f32 to vector<1x128xf32>
    %18 = arith.mulf %16, %17 : vector<1x128xf32>
    %19 = arith.mulf %15, %15 : vector<1x128xf32>
    %20 = arith.subf %18, %19 : vector<1x128xf32>
    %c0_13 = arith.constant 0 : index
    %c0_14 = arith.constant 0 : index
    %21 = vector.load %arg10[%c0_13, %c0_14] : memref<1x128xf32, #tpu.memory_space<vmem>>, vector<1x128xf32>
    %cst_15 = arith.constant 9.99999974E-6 : f32
    %22 = vector.broadcast %cst_15 : f32 to vector<1x128xf32>
    %23 = arith.addf %20, %22 : vector<1x128xf32>
    %24 = math.rsqrt %23 : vector<1x128xf32>
    %25 = arith.mulf %21, %24 : vector<1x128xf32>
    %26 = vector.broadcast %25 : vector<1x128xf32> to vector<32x128xf32>
    %27 = arith.mulf %2, %26 : vector<32x128xf32>
    %c0_16 = arith.constant 0 : index
    %c0_17 = arith.constant 0 : index
    %28 = vector.load %arg11[%c0_16, %c0_17] : memref<1x128xf32, #tpu.memory_space<vmem>>, vector<1x128xf32>
    %29 = arith.mulf %15, %25 : vector<1x128xf32>
    %30 = arith.subf %28, %29 : vector<1x128xf32>
    %31 = vector.broadcast %30 : vector<1x128xf32> to vector<32x128xf32>
    %32 = arith.addf %27, %31 : vector<32x128xf32>
    %33 = tpu.iota {dimensions = array<i32: 1>} : vector<2x16x128xi32>
    %34 = vector.shape_cast %33 : vector<2x16x128xi32> to vector<32x128xi32>
    %35 = arith.truncf %32 : vector<32x128xf32> to vector<32x128xbf16>
    %c4_i32 = arith.constant 4 : i32
    %36 = vector.broadcast %c4_i32 : i32 to vector<32x128xi32>
    %37 = arith.cmpi sge, %34, %36 : vector<32x128xi32>
    %c4_i32_18 = arith.constant 4 : i32
    %38 = tpu.dynamic_rotate %32 by %c4_i32_18 dim 0 : vector<32x128xf32>, i32 -> vector<32x128xf32>
    %cst_19 = arith.constant 0.000000e+00 : f32
    %39 = vector.broadcast %cst_19 : f32 to vector<32x128xf32>
    %40 = arith.select %37, %38, %39 : vector<32x128xi1>, vector<32x128xf32>
    %41 = arith.truncf %40 : vector<32x128xf32> to vector<32x128xbf16>
    %c12_i32 = arith.constant 12 : i32
    %42 = vector.broadcast %c12_i32 : i32 to vector<32x128xi32>
    %43 = arith.cmpi slt, %34, %42 : vector<32x128xi32>
    %c28_i32 = arith.constant 28 : i32
    %44 = tpu.dynamic_rotate %32 by %c28_i32 dim 0 : vector<32x128xf32>, i32 -> vector<32x128xf32>
    %cst_20 = arith.constant 0.000000e+00 : f32
    %45 = vector.broadcast %cst_20 : f32 to vector<32x128xf32>
    %46 = arith.select %43, %44, %45 : vector<32x128xi1>, vector<32x128xf32>
    %47 = arith.truncf %46 : vector<32x128xf32> to vector<32x128xbf16>
    %c0_21 = arith.constant 0 : index
    %c0_22 = arith.constant 0 : index
    %48 = vector.load %arg2[%c0_21, %c0_22] : memref<128x128xbf16, #tpu.memory_space<vmem>>, vector<128x128xbf16>
    %cst_23 = arith.constant dense<0.000000e+00> : vector<32x128xf32>
    %49 = tpu.matmul %41, %48, %cst_23 {dimension_numbers = #tpu.dot_dimension_numbers<[1], [0], [0], [1], [0, 0, 1, 1], [], []>} : vector<32x128xbf16>, vector<128x128xbf16>, vector<32x128xf32> -> vector<32x128xf32>
    %c0_24 = arith.constant 0 : index
    %c0_25 = arith.constant 0 : index
    %50 = vector.load %arg3[%c0_24, %c0_25] : memref<128x128xbf16, #tpu.memory_space<vmem>>, vector<128x128xbf16>
    %cst_26 = arith.constant dense<0.000000e+00> : vector<32x128xf32>
    %51 = tpu.matmul %35, %50, %cst_26 {dimension_numbers = #tpu.dot_dimension_numbers<[1], [0], [0], [1], [0, 0, 1, 1], [], []>} : vector<32x128xbf16>, vector<128x128xbf16>, vector<32x128xf32> -> vector<32x128xf32>
    %52 = arith.addf %49, %51 : vector<32x128xf32>
    %c0_27 = arith.constant 0 : index
    %c0_28 = arith.constant 0 : index
    %53 = vector.load %arg4[%c0_27, %c0_28] : memref<128x128xbf16, #tpu.memory_space<vmem>>, vector<128x128xbf16>
    %cst_29 = arith.constant dense<0.000000e+00> : vector<32x128xf32>
    %54 = tpu.matmul %47, %53, %cst_29 {dimension_numbers = #tpu.dot_dimension_numbers<[1], [0], [0], [1], [0, 0, 1, 1], [], []>} : vector<32x128xbf16>, vector<128x128xbf16>, vector<32x128xf32> -> vector<32x128xf32>
    %55 = arith.addf %52, %54 : vector<32x128xf32>
    %cst_30 = arith.constant dense<0.000000e+00> : vector<128xf32>
    %56 = vector.multi_reduction <add>, %55, %cst_30 [0] : vector<32x128xf32> to vector<128xf32>
    %57 = vector.shape_cast %56 : vector<128xf32> to vector<1x128xf32>
    %58 = arith.mulf %55, %55 : vector<32x128xf32>
    %cst_31 = arith.constant dense<0.000000e+00> : vector<128xf32>
    %59 = vector.multi_reduction <add>, %58, %cst_31 [0] : vector<32x128xf32> to vector<128xf32>
    %60 = vector.shape_cast %59 : vector<128xf32> to vector<1x128xf32>
    %61 = tpu.concatenate %57, %60 in 0 : vector<1x128xf32>, vector<1x128xf32> -> vector<2x128xf32>
    %c0_32 = arith.constant 0 : index
    %c0_33 = arith.constant 0 : index
    %62 = vector.load %arg6[%c0_32, %c0_33] : memref<128x8xf32, #tpu.memory_space<vmem>>, vector<128x8xf32>
    %cst_34 = arith.constant dense<0.000000e+00> : vector<2x8xf32>
    %63 = tpu.matmul %61, %62, %cst_34 {dimension_numbers = #tpu.dot_dimension_numbers<[1], [0], [0], [1], [0, 0, 1, 1], [], []>} : vector<2x128xf32>, vector<128x8xf32>, vector<2x8xf32> -> vector<2x8xf32>
    %c0_35 = arith.constant 0 : index
    %c0_36 = arith.constant 0 : index
    %64 = vector.load %arg7[%c0_35, %c0_36] : memref<8x128xf32, #tpu.memory_space<vmem>>, vector<8x128xf32>
    %cst_37 = arith.constant dense<0.000000e+00> : vector<2x128xf32>
    %65 = tpu.matmul %63, %64, %cst_37 {dimension_numbers = #tpu.dot_dimension_numbers<[1], [0], [0], [1], [0, 0, 1, 1], [], []>} : vector<2x8xf32>, vector<8x128xf32>, vector<2x128xf32> -> vector<2x128xf32>
    %66 = vector.extract_strided_slice %65 {offsets = [0, 0], sizes = [1, 128], strides = [1, 1]} : vector<2x128xf32> to vector<1x128xf32>
    %cst_38 = arith.constant 0.001953125 : f32
    %67 = vector.broadcast %cst_38 : f32 to vector<1x128xf32>
    %68 = arith.mulf %66, %67 : vector<1x128xf32>
    %69 = vector.extract_strided_slice %65 {offsets = [1, 0], sizes = [1, 128], strides = [1, 1]} : vector<2x128xf32> to vector<1x128xf32>
    %cst_39 = arith.constant 0.001953125 : f32
    %70 = vector.broadcast %cst_39 : f32 to vector<1x128xf32>
    %71 = arith.mulf %69, %70 : vector<1x128xf32>
    %72 = arith.mulf %68, %68 : vector<1x128xf32>
    %73 = arith.subf %71, %72 : vector<1x128xf32>
    %c0_40 = arith.constant 0 : index
    %c0_41 = arith.constant 0 : index
    %74 = vector.load %arg12[%c0_40, %c0_41] : memref<1x128xf32, #tpu.memory_space<vmem>>, vector<1x128xf32>
    %cst_42 = arith.constant 9.99999974E-6 : f32
    %75 = vector.broadcast %cst_42 : f32 to vector<1x128xf32>
    %76 = arith.addf %73, %75 : vector<1x128xf32>
    %77 = math.rsqrt %76 : vector<1x128xf32>
    %78 = arith.mulf %74, %77 : vector<1x128xf32>
    %79 = vector.broadcast %78 : vector<1x128xf32> to vector<32x128xf32>
    %80 = arith.mulf %55, %79 : vector<32x128xf32>
    %c0_43 = arith.constant 0 : index
    %c0_44 = arith.constant 0 : index
    %81 = vector.load %arg13[%c0_43, %c0_44] : memref<1x128xf32, #tpu.memory_space<vmem>>, vector<1x128xf32>
    %82 = arith.mulf %68, %78 : vector<1x128xf32>
    %83 = arith.subf %81, %82 : vector<1x128xf32>
    %84 = vector.broadcast %83 : vector<1x128xf32> to vector<32x128xf32>
    %85 = arith.addf %80, %84 : vector<32x128xf32>
    %86 = arith.addf %32, %85 : vector<32x128xf32>
    %87 = arith.truncf %86 : vector<32x128xf32> to vector<32x128xbf16>
    %c0_45 = arith.constant 0 : index
    %c0_46 = arith.constant 0 : index
    %88 = vector.load %arg5[%c0_45, %c0_46] : memref<128x512xbf16, #tpu.memory_space<vmem>>, vector<128x512xbf16>
    %cst_47 = arith.constant dense<0.000000e+00> : vector<32x512xf32>
    %89 = tpu.matmul %87, %88, %cst_47 {dimension_numbers = #tpu.dot_dimension_numbers<[1], [0], [0], [1], [0, 0, 1, 1], [], []>} : vector<32x128xbf16>, vector<128x512xbf16>, vector<32x512xf32> -> vector<32x512xf32>
    %cst_48 = arith.constant dense<0.000000e+00> : vector<512xf32>
    %90 = vector.multi_reduction <add>, %89, %cst_48 [0] : vector<32x512xf32> to vector<512xf32>
    %91 = vector.shape_cast %90 : vector<512xf32> to vector<1x512xf32>
    %92 = arith.mulf %89, %89 : vector<32x512xf32>
    %cst_49 = arith.constant dense<0.000000e+00> : vector<512xf32>
    %93 = vector.multi_reduction <add>, %92, %cst_49 [0] : vector<32x512xf32> to vector<512xf32>
    %94 = vector.shape_cast %93 : vector<512xf32> to vector<1x512xf32>
    %95 = tpu.concatenate %91, %94 in 0 : vector<1x512xf32>, vector<1x512xf32> -> vector<2x512xf32>
    %c0_50 = arith.constant 0 : index
    %c0_51 = arith.constant 0 : index
    %96 = vector.load %arg8[%c0_50, %c0_51] : memref<512x32xf32, #tpu.memory_space<vmem>>, vector<512x32xf32>
    %cst_52 = arith.constant dense<0.000000e+00> : vector<2x32xf32>
    %97 = tpu.matmul %95, %96, %cst_52 {dimension_numbers = #tpu.dot_dimension_numbers<[1], [0], [0], [1], [0, 0, 1, 1], [], []>} : vector<2x512xf32>, vector<512x32xf32>, vector<2x32xf32> -> vector<2x32xf32>
    %c0_53 = arith.constant 0 : index
    %c0_54 = arith.constant 0 : index
    %98 = vector.load %arg9[%c0_53, %c0_54] : memref<32x512xf32, #tpu.memory_space<vmem>>, vector<32x512xf32>
    %cst_55 = arith.constant dense<0.000000e+00> : vector<2x512xf32>
    %99 = tpu.matmul %97, %98, %cst_55 {dimension_numbers = #tpu.dot_dimension_numbers<[1], [0], [0], [1], [0, 0, 1, 1], [], []>} : vector<2x32xf32>, vector<32x512xf32>, vector<2x512xf32> -> vector<2x512xf32>
    %100 = vector.extract_strided_slice %99 {offsets = [0, 0], sizes = [1, 512], strides = [1, 1]} : vector<2x512xf32> to vector<1x512xf32>
    %cst_56 = arith.constant 0.001953125 : f32
    %101 = vector.broadcast %cst_56 : f32 to vector<1x512xf32>
    %102 = arith.mulf %100, %101 : vector<1x512xf32>
    %103 = vector.extract_strided_slice %99 {offsets = [1, 0], sizes = [1, 512], strides = [1, 1]} : vector<2x512xf32> to vector<1x512xf32>
    %cst_57 = arith.constant 0.001953125 : f32
    %104 = vector.broadcast %cst_57 : f32 to vector<1x512xf32>
    %105 = arith.mulf %103, %104 : vector<1x512xf32>
    %106 = arith.mulf %102, %102 : vector<1x512xf32>
    %107 = arith.subf %105, %106 : vector<1x512xf32>
    %c0_58 = arith.constant 0 : index
    %c0_59 = arith.constant 0 : index
    %108 = vector.load %arg14[%c0_58, %c0_59] : memref<1x512xf32, #tpu.memory_space<vmem>>, vector<1x512xf32>
    %cst_60 = arith.constant 9.99999974E-6 : f32
    %109 = vector.broadcast %cst_60 : f32 to vector<1x512xf32>
    %110 = arith.addf %107, %109 : vector<1x512xf32>
    %111 = math.rsqrt %110 : vector<1x512xf32>
    %112 = arith.mulf %108, %111 : vector<1x512xf32>
    %113 = vector.broadcast %112 : vector<1x512xf32> to vector<32x512xf32>
    %114 = arith.mulf %89, %113 : vector<32x512xf32>
    %c0_61 = arith.constant 0 : index
    %c0_62 = arith.constant 0 : index
    %115 = vector.load %arg15[%c0_61, %c0_62] : memref<1x512xf32, #tpu.memory_space<vmem>>, vector<1x512xf32>
    %116 = arith.mulf %102, %112 : vector<1x512xf32>
    %117 = arith.subf %115, %116 : vector<1x512xf32>
    %118 = vector.broadcast %117 : vector<1x512xf32> to vector<32x512xf32>
    %119 = arith.addf %114, %118 : vector<32x512xf32>
    %c0_63 = arith.constant 0 : index
    %c0_64 = arith.constant 0 : index
    %120 = vector.load %arg16[%c0_63, %c0_64] : memref<32x512xf32, #tpu.memory_space<vmem>>, vector<32x512xf32>
    tpu.vector_store %arg16[%c0_63, %c0_64], %119 {strides = array<i32>} : memref<32x512xf32, #tpu.memory_space<vmem>>, vector<32x512xf32>,
    return
  }
}

</mosaic_0001>

<llo_original>
// kernel: bypass_forward.1
$region0: #{bypass_forward.1}
  #allocation0 [shape = 'u32[]', space=smem, size = 0x4, offset = 0x4, fixed_abs, tag = 'smem constant byte address 0x4 - core index']
  #allocation1 [shape = 'u32[144,128]{1,0:T(1,128)}', space=vmem, size = 0x12000, scoped, tag = 'internal scratch']
  %s0 = inlined_call_operand.vmem [shape: bf16[32,512], index: 0, kind: input, shape index: {}]
  %s1 = inlined_call_operand.vmem [shape: bf16[512,128], index: 1, kind: input, shape index: {}]
  %s2 = inlined_call_operand.vmem [shape: bf16[128,128], index: 2, kind: input, shape index: {}]
  %s3 = inlined_call_operand.vmem [shape: bf16[128,128], index: 3, kind: input, shape index: {}]
  %s4 = inlined_call_operand.vmem [shape: bf16[128,128], index: 4, kind: input, shape index: {}]
  %s5 = inlined_call_operand.vmem [shape: bf16[128,512], index: 5, kind: input, shape index: {}]
  %s6 = inlined_call_operand.vmem [shape: f32[128,8], index: 6, kind: input, shape index: {}]
  %s7 = inlined_call_operand.vmem [shape: f32[8,128], index: 7, kind: input, shape index: {}]
  %s8 = inlined_call_operand.vmem [shape: f32[512,32], index: 8, kind: input, shape index: {}]
  %s9 = inlined_call_operand.vmem [shape: f32[32,512], index: 9, kind: input, shape index: {}]
  %s10 = inlined_call_operand.vmem [shape: f32[1,128], index: 10, kind: input, shape index: {}]
  %s11 = inlined_call_operand.vmem [shape: f32[1,128], index: 11, kind: input, shape index: {}]
  %s12 = inlined_call_operand.vmem [shape: f32[1,128], index: 12, kind: input, shape index: {}]
  %s13 = inlined_call_operand.vmem [shape: f32[1,128], index: 13, kind: input, shape index: {}]
  %s14 = inlined_call_operand.vmem [shape: f32[1,512], index: 14, kind: input, shape index: {}]
  %s15 = inlined_call_operand.vmem [shape: f32[1,512], index: 15, kind: input, shape index: {}]
  %s16 = inlined_call_operand.vmem [shape: f32[32,512], index: 16, kind: output, shape index: {}]
  %s17 = sld [smem:[#allocation0]]
  $region74: #{bypass_forward.1} parent=0
    _
  %s19 = ssub.s32 1, %s17
  %s20 = scalar_select 0, %s19, %s17
  // Predicated region
  $region2: #{bypass_forward.1} parent=0 // pred_check
    _
  $region3: #{bypass_forward.1} parent=0 // pred_check_branch
    %22 = sbr.rel (0) target = $region5
  $region4: #{bypass_forward.1} parent=0 // pred_region
    _
  $region5: #{bypass_forward.1} parent=0 // pred_fallthru
    _
  // Predicated region
  $region6: #{bypass_forward.1} parent=0 // pred_check
    _
  $region7: #{bypass_forward.1} parent=0 // pred_check_branch
    %24 = sbr.rel (0) target = $region9
  $region8: #{bypass_forward.1} parent=0 // pred_region
    _
  $region9: #{bypass_forward.1} parent=0 // pred_fallthru
    _
  // Predicated region
  $region10: #{bypass_forward.1} parent=0 // pred_check
    _
  $region11: #{bypass_forward.1} parent=0 // pred_check_branch
    %26 = sbr.rel (0) target = $region13
  $region12: #{bypass_forward.1} parent=0 // pred_region
    _
  $region13: #{bypass_forward.1} parent=0 // pred_fallthru
    _
  // Predicated region
  $region14: #{bypass_forward.1} parent=0 // pred_check
    _
  $region15: #{bypass_forward.1} parent=0 // pred_check_branch
    %28 = sbr.rel (0) target = $region17
  $region16: #{bypass_forward.1} parent=0 // pred_region
    _
  $region17: #{bypass_forward.1} parent=0 // pred_fallthru
    _
  // Predicated region
  $region18: #{bypass_forward.1} parent=0 // pred_check
    _
  $region19: #{bypass_forward.1} parent=0 // pred_check_branch
    %30 = sbr.rel (0) target = $region21
  $region20: #{bypass_forward.1} parent=0 // pred_region
    _
  $region21: #{bypass_forward.1} parent=0 // pred_fallthru
    _
  // Predicated region
  $region22: #{bypass_forward.1} parent=0 // pred_check
    _
  $region23: #{bypass_forward.1} parent=0 // pred_check_branch
    %32 = sbr.rel (0) target = $region25
  $region24: #{bypass_forward.1} parent=0 // pred_region
    _
  $region25: #{bypass_forward.1} parent=0 // pred_fallthru
    _
  // Predicated region
  $region26: #{bypass_forward.1} parent=0 // pred_check
    _
  $region27: #{bypass_forward.1} parent=0 // pred_check_branch
    %34 = sbr.rel (0) target = $region29
  $region28: #{bypass_forward.1} parent=0 // pred_region
    _
  $region29: #{bypass_forward.1} parent=0 // pred_fallthru
    _
  // Predicated region
  $region30: #{bypass_forward.1} parent=0 // pred_check
    _
  $region31: #{bypass_forward.1} parent=0 // pred_check_branch
    %36 = sbr.rel (0) target = $region33
  $region32: #{bypass_forward.1} parent=0 // pred_region
    _
  $region33: #{bypass_forward.1} parent=0 // pred_fallthru
    _
  // Predicated region
  $region34: #{bypass_forward.1} parent=0 // pred_check
    _
  $region35: #{bypass_forward.1} parent=0 // pred_check_branch
    %38 = sbr.rel (0) target = $region37
  $region36: #{bypass_forward.1} parent=0 // pred_region
    _
  $region37: #{bypass_forward.1} parent=0 // pred_fallthru
    _
  // Predicated region
  $region38: #{bypass_forward.1} parent=0 // pred_check
    _
  $region39: #{bypass_forward.1} parent=0 // pred_check_branch
    %40 = sbr.rel (0) target = $region41
  $region40: #{bypass_forward.1} parent=0 // pred_region
    _
  $region41: #{bypass_forward.1} parent=0 // pred_fallthru
    _
  // Predicated region
  $region42: #{bypass_forward.1} parent=0 // pred_check
    _
  $region43: #{bypass_forward.1} parent=0 // pred_check_branch
    %42 = sbr.rel (0) target = $region45
  $region44: #{bypass_forward.1} parent=0 // pred_region
    _
  $region45: #{bypass_forward.1} parent=0 // pred_fallthru
    _
  // Predicated region
  $region46: #{bypass_forward.1} parent=0 // pred_check
    _
  $region47: #{bypass_forward.1} parent=0 // pred_check_branch
    %44 = sbr.rel (0) target = $region49
  $region48: #{bypass_forward.1} parent=0 // pred_region
    _
  $region49: #{bypass_forward.1} parent=0 // pred_fallthru
    _
  // Predicated region
  $region50: #{bypass_forward.1} parent=0 // pred_check
    _
  $region51: #{bypass_forward.1} parent=0 // pred_check_branch
    %46 = sbr.rel (0) target = $region53
  $region52: #{bypass_forward.1} parent=0 // pred_region
    _
  $region53: #{bypass_forward.1} parent=0 // pred_fallthru
    _
  // Predicated region
  $region54: #{bypass_forward.1} parent=0 // pred_check
    _
  $region55: #{bypass_forward.1} parent=0 // pred_check_branch
    %48 = sbr.rel (0) target = $region57
  $region56: #{bypass_forward.1} parent=0 // pred_region
    _
  $region57: #{bypass_forward.1} parent=0 // pred_fallthru
    _
  // Predicated region
  $region58: #{bypass_forward.1} parent=0 // pred_check
    _
  $region59: #{bypass_forward.1} parent=0 // pred_check_branch
    %50 = sbr.rel (0) target = $region61
  $region60: #{bypass_forward.1} parent=0 // pred_region
    _
  $region61: #{bypass_forward.1} parent=0 // pred_fallthru
    _
  // Predicated region
  $region62: #{bypass_forward.1} parent=0 // pred_check
    _
  $region63: #{bypass_forward.1} parent=0 // pred_check_branch
    %52 = sbr.rel (0) target = $region65
  $region64: #{bypass_forward.1} parent=0 // pred_region
    _
  $region65: #{bypass_forward.1} parent=0 // pred_fallthru
    _
  %v54 = vld [vmem:[%s0] sm:$0xff]
  %v55 = vld [vmem:[%s0 + $0x8] sm:$0xff]
  %v56 = vld [vmem:[%s0 + $0x10] sm:$0xff]
  %v57 = vld [vmem:[%s0 + $0x18] sm:$0xff]
  %v58 = vld [vmem:[%s0 + $0x20] sm:$0xff]
  %v59 = vld [vmem:[%s0 + $0x28] sm:$0xff]
  %v60 = vld [vmem:[%s0 + $0x30] sm:$0xff]
  %v61 = vld [vmem:[%s0 + $0x38] sm:$0xff]
  %v62 = vld [vmem:[%s1] sm:$0xf]
  %v63 = vld [vmem:[%s1 + $0x4] sm:$0xf]
  %v64 = vld [vmem:[%s1 + $0x8] sm:$0xf]
  %v65 = vld [vmem:[%s1 + $0xc] sm:$0xf]
  %v66 = vld [vmem:[%s1 + $0x10] sm:$0xf]
  %v67 = vld [vmem:[%s1 + $0x14] sm:$0xf]
  %v68 = vld [vmem:[%s1 + $0x18] sm:$0xf]
  %v69 = vld [vmem:[%s1 + $0x1c] sm:$0xf]
  %v70 = vld [vmem:[%s1 + $0x20] sm:$0xf]
  %v71 = vld [vmem:[%s1 + $0x24] sm:$0xf]
  %v72 = vld [vmem:[%s1 + $0x28] sm:$0xf]
  %v73 = vld [vmem:[%s1 + $0x2c] sm:$0xf]
  %v74 = vld [vmem:[%s1 + $0x30] sm:$0xf]
  %v75 = vld [vmem:[%s1 + $0x34] sm:$0xf]
  %v76 = vld [vmem:[%s1 + $0x38] sm:$0xf]
  %v77 = vld [vmem:[%s1 + $0x3c] sm:$0xf]
  %v78 = vld [vmem:[%s1 + $0x40] sm:$0xf]
  %v79 = vld [vmem:[%s1 + $0x44] sm:$0xf]
  %v80 = vld [vmem:[%s1 + $0x48] sm:$0xf]
  %v81 = vld [vmem:[%s1 + $0x4c] sm:$0xf]
  %v82 = vld [vmem:[%s1 + $0x50] sm:$0xf]
  %v83 = vld [vmem:[%s1 + $0x54] sm:$0xf]
  %v84 = vld [vmem:[%s1 + $0x58] sm:$0xf]
  %v85 = vld [vmem:[%s1 + $0x5c] sm:$0xf]
  %v86 = vld [vmem:[%s1 + $0x60] sm:$0xf]
  %v87 = vld [vmem:[%s1 + $0x64] sm:$0xf]
  %v88 = vld [vmem:[%s1 + $0x68] sm:$0xf]
  %v89 = vld [vmem:[%s1 + $0x6c] sm:$0xf]
  %v90 = vld [vmem:[%s1 + $0x70] sm:$0xf]
  %v91 = vld [vmem:[%s1 + $0x74] sm:$0xf]
  %v92 = vld [vmem:[%s1 + $0x78] sm:$0xf]
  %v93 = vld [vmem:[%s1 + $0x7c] sm:$0xf]
  %v94 = vld [vmem:[%s1 + $0x80] sm:$0xf]
  %v95 = vld [vmem:[%s1 + $0x84] sm:$0xf]
  %v96 = vld [vmem:[%s1 + $0x88] sm:$0xf]
  %v97 = vld [vmem:[%s1 + $0x8c] sm:$0xf]
  %v98 = vld [vmem:[%s1 + $0x90] sm:$0xf]
  %v99 = vld [vmem:[%s1 + $0x94] sm:$0xf]
  %v100 = vld [vmem:[%s1 + $0x98] sm:$0xf]
  %v101 = vld [vmem:[%s1 + $0x9c] sm:$0xf]
  %v102 = vld [vmem:[%s1 + $0xa0] sm:$0xf]
  %v103 = vld [vmem:[%s1 + $0xa4] sm:$0xf]
  %v104 = vld [vmem:[%s1 + $0xa8] sm:$0xf]
  %v105 = vld [vmem:[%s1 + $0xac] sm:$0xf]
  %v106 = vld [vmem:[%s1 + $0xb0] sm:$0xf]
  %v107 = vld [vmem:[%s1 + $0xb4] sm:$0xf]
  %v108 = vld [vmem:[%s1 + $0xb8] sm:$0xf]
  %v109 = vld [vmem:[%s1 + $0xbc] sm:$0xf]
  %v110 = vld [vmem:[%s1 + $0xc0] sm:$0xf]
  %v111 = vld [vmem:[%s1 + $0xc4] sm:$0xf]
  %v112 = vld [vmem:[%s1 + $0xc8] sm:$0xf]
  %v113 = vld [vmem:[%s1 + $0xcc] sm:$0xf]
  %v114 = vld [vmem:[%s1 + $0xd0] sm:$0xf]
  %v115 = vld [vmem:[%s1 + $0xd4] sm:$0xf]
  %v116 = vld [vmem:[%s1 + $0xd8] sm:$0xf]
  %v117 = vld [vmem:[%s1 + $0xdc] sm:$0xf]
  %v118 = vld [vmem:[%s1 + $0xe0] sm:$0xf]
  %v119 = vld [vmem:[%s1 + $0xe4] sm:$0xf]
  %v120 = vld [vmem:[%s1 + $0xe8] sm:$0xf]
  %v121 = vld [vmem:[%s1 + $0xec] sm:$0xf]
  %v122 = vld [vmem:[%s1 + $0xf0] sm:$0xf]
  %v123 = vld [vmem:[%s1 + $0xf4] sm:$0xf]
  %v124 = vld [vmem:[%s1 + $0xf8] sm:$0xf]
  %v125 = vld [vmem:[%s1 + $0xfc] sm:$0xf]
  %v134 = vunpack.c.l.b16 %v54
  %v135 = vunpack.c.h.b16 %v54
  %v136 = vunpack.c.l.b16 %v55
  %v137 = vunpack.c.h.b16 %v55
  %v138 = vunpack.c.l.b16 %v56
  %v139 = vunpack.c.h.b16 %v56
  %v140 = vunpack.c.l.b16 %v57
  %v141 = vunpack.c.h.b16 %v57
  %v142 = vunpack.c.l.b16 %v58
  %v143 = vunpack.c.h.b16 %v58
  %v144 = vunpack.c.l.b16 %v59
  %v145 = vunpack.c.h.b16 %v59
  %v146 = vunpack.c.l.b16 %v60
  %v147 = vunpack.c.h.b16 %v60
  %v148 = vunpack.c.l.b16 %v61
  %v149 = vunpack.c.h.b16 %v61
  %v150 = vpack.c.b16 %v138, %v134
  %v151 = vpack.c.b16 %v139, %v135
  %v152 = vpack.c.b16 %v140, %v136
  %v153 = vpack.c.b16 %v141, %v137
  %v154 = vpack.c.b16 %v146, %v142
  %v155 = vpack.c.b16 %v147, %v143
  %v156 = vpack.c.b16 %v148, %v144
  %v157 = vpack.c.b16 %v149, %v145
  %v230 = vunpack.c.l.b16 %v62
  %v231 = vunpack.c.l.b16 %v63
  %v232 = vunpack.c.l.b16 %v64
  %v233 = vunpack.c.l.b16 %v65
  %v234 = vunpack.c.l.b16 %v66
  %v235 = vunpack.c.l.b16 %v67
  %v236 = vunpack.c.l.b16 %v68
  %v237 = vunpack.c.l.b16 %v69
  %v238 = vunpack.c.l.b16 %v70
  %v239 = vunpack.c.l.b16 %v71
  %v240 = vunpack.c.l.b16 %v72
  %v241 = vunpack.c.l.b16 %v73
  %v242 = vunpack.c.l.b16 %v74
  %v243 = vunpack.c.l.b16 %v75
  %v244 = vunpack.c.l.b16 %v76
  %v245 = vunpack.c.l.b16 %v77
  %v246 = vunpack.c.l.b16 %v78
  %v247 = vunpack.c.l.b16 %v79
  %v248 = vunpack.c.l.b16 %v80
  %v249 = vunpack.c.l.b16 %v81
  %v250 = vunpack.c.l.b16 %v82
  %v251 = vunpack.c.l.b16 %v83
  %v252 = vunpack.c.l.b16 %v84
  %v253 = vunpack.c.l.b16 %v85
  %v254 = vunpack.c.l.b16 %v86
  %v255 = vunpack.c.l.b16 %v87
  %v256 = vunpack.c.l.b16 %v88
  %v257 = vunpack.c.l.b16 %v89
  %v258 = vunpack.c.l.b16 %v90
  %v259 = vunpack.c.l.b16 %v91
  %v260 = vunpack.c.l.b16 %v92
  %v261 = vunpack.c.l.b16 %v93
  %v262 = vunpack.c.l.b16 %v94
  %v263 = vunpack.c.l.b16 %v95
  %v264 = vunpack.c.l.b16 %v96
  %v265 = vunpack.c.l.b16 %v97
  %v266 = vunpack.c.l.b16 %v98
  %v267 = vunpack.c.l.b16 %v99
  %v268 = vunpack.c.l.b16 %v100
  %v269 = vunpack.c.l.b16 %v101
  %v270 = vunpack.c.l.b16 %v102
  %v271 = vunpack.c.l.b16 %v103
  %v272 = vunpack.c.l.b16 %v104
  %v273 = vunpack.c.l.b16 %v105
  %v274 = vunpack.c.l.b16 %v106
  %v275 = vunpack.c.l.b16 %v107
  %v276 = vunpack.c.l.b16 %v108
  %v277 = vunpack.c.l.b16 %v109
  %v278 = vunpack.c.l.b16 %v110
  %v279 = vunpack.c.l.b16 %v111
  %v280 = vunpack.c.l.b16 %v112
  %v281 = vunpack.c.l.b16 %v113
  %v282 = vunpack.c.l.b16 %v114
  %v283 = vunpack.c.l.b16 %v115
  %v284 = vunpack.c.l.b16 %v116
  %v285 = vunpack.c.l.b16 %v117
  %v286 = vunpack.c.l.b16 %v118
  %v287 = vunpack.c.l.b16 %v119
  %v288 = vunpack.c.l.b16 %v120
  %v289 = vunpack.c.l.b16 %v121
  %v290 = vunpack.c.l.b16 %v122
  %v291 = vunpack.c.l.b16 %v123
  %v292 = vunpack.c.l.b16 %v124
  %v293 = vunpack.c.l.b16 %v125
  %v294 = vpack.c.b16 %v231, %v230
  %v295 = vpack.c.b16 %v233, %v232
  %v296 = vpack.c.b16 %v235, %v234
  %v297 = vpack.c.b16 %v237, %v236
  %v298 = vpack.c.b16 %v239, %v238
  %v299 = vpack.c.b16 %v241, %v240
  %v300 = vpack.c.b16 %v243, %v242
  %v301 = vpack.c.b16 %v245, %v244
  %v302 = vpack.c.b16 %v247, %v246
  %v303 = vpack.c.b16 %v249, %v248
  %v304 = vpack.c.b16 %v251, %v250
  %v305 = vpack.c.b16 %v253, %v252
  %v306 = vpack.c.b16 %v255, %v254
  %v307 = vpack.c.b16 %v257, %v256
  %v308 = vpack.c.b16 %v259, %v258
  %v309 = vpack.c.b16 %v261, %v260
  %v310 = vpack.c.b16 %v263, %v262
  %v311 = vpack.c.b16 %v265, %v264
  %v312 = vpack.c.b16 %v267, %v266
  %v313 = vpack.c.b16 %v269, %v268
  %v314 = vpack.c.b16 %v271, %v270
  %v315 = vpack.c.b16 %v273, %v272
  %v316 = vpack.c.b16 %v275, %v274
  %v317 = vpack.c.b16 %v277, %v276
  %v318 = vpack.c.b16 %v279, %v278
  %v319 = vpack.c.b16 %v281, %v280
  %v320 = vpack.c.b16 %v283, %v282
  %v321 = vpack.c.b16 %v285, %v284
  %v322 = vpack.c.b16 %v287, %v286
  %v323 = vpack.c.b16 %v289, %v288
  %v324 = vpack.c.b16 %v291, %v290
  %v325 = vpack.c.b16 %v293, %v292
  %358 = vmatprep.subr.bf16.mxu0 0
  %359 = vmatpush1.bf16.msra.mxu0 %v301
  %360 = vmatprep.subr.bf16.mxu0 0
  %361 = vmatpush1.bf16.msra.mxu0 %v300
  %362 = vmatprep.subr.bf16.mxu0 0
  %363 = vmatpush1.bf16.msra.mxu0 %v299
  %364 = vmatprep.subr.bf16.mxu0 0
  %365 = vmatpush1.bf16.msra.mxu0 %v298
  %366 = vmatprep.subr.bf16.mxu0 0
  %367 = vmatpush1.bf16.msra.mxu0 %v297
  %368 = vmatprep.subr.bf16.mxu0 0
  %369 = vmatpush1.bf16.msra.mxu0 %v296
  %370 = vmatprep.subr.bf16.mxu0 0
  %371 = vmatpush1.bf16.msra.mxu0 %v295
  %372 = vmatprep.subr.bf16.mxu0 0
  %373 = vmatpush1.bf16.msra.mxu0 %v294
  %374 = vmatprep.subr.bf16.mxu0 0
  %375 = vmatpush2.bf16.msra.mxu0 %v309
  %376 = vmatprep.subr.bf16.mxu0 0
  %377 = vmatpush2.bf16.msra.mxu0 %v308
  %378 = vmatprep.subr.bf16.mxu0 0
  %379 = vmatpush2.bf16.msra.mxu0 %v307
  %380 = vmatprep.subr.bf16.mxu0 0
  %381 = vmatpush2.bf16.msra.mxu0 %v306
  %382 = vmatprep.subr.bf16.mxu0 0
  %383 = vmatpush2.bf16.msra.mxu0 %v305
  %384 = vmatprep.subr.bf16.mxu0 0
  %385 = vmatpush2.bf16.msra.mxu0 %v304
  %386 = vmatprep.subr.bf16.mxu0 0
  %387 = vmatpush2.bf16.msra.mxu0 %v303
  %388 = vmatprep.subr.bf16.mxu0 0
  %389 = vmatpush2.bf16.msra.mxu0 %v302
  %390 = vmatprep.mubr.bf16.mxu0 %v151
  %391 = vmatmul.mubr.bf16.gmra.mxu0 %v150
  %v392 = vpop.f32.mrf.mxu0
  %v393 = vadd.f32 0.0, %v392
  %v394 = vpop.f32.mrf.mxu0
  %v395 = vpop.f32.mrf.mxu0
  %v396 = vadd.f32 0.0, %v395
  %v397 = vpop.f32.mrf.mxu0
  %398 = vmatprep.mubr.bf16.mxu0 %v155
  %399 = vmatmul.mubr.bf16.gmra.mxu0 %v154
  %v400 = vpop.f32.mrf.mxu0
  %v401 = vadd.f32 0.0, %v400
  %v402 = vpop.f32.mrf.mxu0
  %v403 = vpop.f32.mrf.mxu0
  %v404 = vadd.f32 0.0, %v403
  %v405 = vpop.f32.mrf.mxu0
  %406 = vdwg.mxu0
  %407 = vmatprep.subr.bf16.mxu0 0
  %408 = vmatpush1.bf16.msra.mxu0 %v317
  %409 = vmatprep.subr.bf16.mxu0 0
  %410 = vmatpush1.bf16.msra.mxu0 %v316
  %411 = vmatprep.subr.bf16.mxu0 0
  %412 = vmatpush1.bf16.msra.mxu0 %v315
  %413 = vmatprep.subr.bf16.mxu0 0
  %414 = vmatpush1.bf16.msra.mxu0 %v314
  %415 = vmatprep.subr.bf16.mxu0 0
  %416 = vmatpush1.bf16.msra.mxu0 %v313
  %417 = vmatprep.subr.bf16.mxu0 0
  %418 = vmatpush1.bf16.msra.mxu0 %v312
  %419 = vmatprep.subr.bf16.mxu0 0
  %420 = vmatpush1.bf16.msra.mxu0 %v311
  %421 = vmatprep.subr.bf16.mxu0 0
  %422 = vmatpush1.bf16.msra.mxu0 %v310
  %423 = vmatprep.subr.bf16.mxu0 0
  %424 = vmatpush2.bf16.msra.mxu0 %v325
  %425 = vmatprep.subr.bf16.mxu0 0
  %426 = vmatpush2.bf16.msra.mxu0 %v324
  %427 = vmatprep.subr.bf16.mxu0 0
  %428 = vmatpush2.bf16.msra.mxu0 %v323
  %429 = vmatprep.subr.bf16.mxu0 0
  %430 = vmatpush2.bf16.msra.mxu0 %v322
  %431 = vmatprep.subr.bf16.mxu0 0
  %432 = vmatpush2.bf16.msra.mxu0 %v321
  %433 = vmatprep.subr.bf16.mxu0 0
  %434 = vmatpush2.bf16.msra.mxu0 %v320
  %435 = vmatprep.subr.bf16.mxu0 0
  %436 = vmatpush2.bf16.msra.mxu0 %v319
  %437 = vmatprep.subr.bf16.mxu0 0
  %438 = vmatpush2.bf16.msra.mxu0 %v318
  %439 = vmatprep.mubr.bf16.mxu0 %v153
  %440 = vmatmul.mubr.bf16.gmra.mxu0 %v152
  %v441 = vpop.f32.mrf.mxu0
  %v442 = vadd.f32 %v393, %v441
  %v443 = vpop.f32.mrf.mxu0
  %v444 = vpop.f32.mrf.mxu0
  %v445 = vadd.f32 %v396, %v444
  %v446 = vpop.f32.mrf.mxu0
  %447 = vmatprep.mubr.bf16.mxu0 %v157
  %448 = vmatmul.mubr.bf16.gmra.mxu0 %v156
  %v449 = vpop.f32.mrf.mxu0
  %v450 = vadd.f32 %v401, %v449
  %v451 = vpop.f32.mrf.mxu0
  %v452 = vpop.f32.mrf.mxu0
  %v453 = vadd.f32 %v404, %v452
  %v454 = vpop.f32.mrf.mxu0
  %455 = vdwg.mxu0
  %v456 = vadd.f32 %v442, %v445
  %v457 = vadd.f32 %v456, %v450
  %v458 = vadd.f32 %v457, %v453
  %v459 = vrot.slane %v458, 4
  %v460 = vadd.f32 %v458, %v459
  %v461 = vrot.slane %v460, 2
  %v462 = vadd.f32 %v460, %v461
  %v463 = vrot.slane %v462, 1
  %v464 = vadd.f32 %v462, %v463
  %v465 = vmul.f32 %v442, %v442
  %v466 = vmul.f32 %v445, %v445
  %v467 = vmul.f32 %v450, %v450
  %v468 = vmul.f32 %v453, %v453
  %v469 = vadd.f32 %v465, %v466
  %v470 = vadd.f32 %v469, %v467
  %v471 = vadd.f32 %v470, %v468
  %v472 = vrot.slane %v471, 4
  %v473 = vadd.f32 %v471, %v472
  %v474 = vrot.slane %v473, 2
  %v475 = vadd.f32 %v473, %v474
  %v476 = vrot.slane %v475, 1
  %v477 = vadd.f32 %v475, %v476
  %vm478 = vcmask 1040384
  %v479 = vsel %vm478, %v464, %v477
  %v480 = vld [vmem:[%s6] sm:$0xff]
  %v481 = vld [vmem:[%s6 + $0x8] sm:$0xff]
  %v482 = vld [vmem:[%s6 + $0x10] sm:$0xff]
  %v483 = vld [vmem:[%s6 + $0x18] sm:$0xff]
  %v484 = vld [vmem:[%s6 + $0x20] sm:$0xff]
  %v485 = vld [vmem:[%s6 + $0x28] sm:$0xff]
  %v486 = vld [vmem:[%s6 + $0x30] sm:$0xff]
  %v487 = vld [vmem:[%s6 + $0x38] sm:$0xff]
  %v488 = vld [vmem:[%s6 + $0x40] sm:$0xff]
  %v489 = vld [vmem:[%s6 + $0x48] sm:$0xff]
  %v490 = vld [vmem:[%s6 + $0x50] sm:$0xff]
  %v491 = vld [vmem:[%s6 + $0x58] sm:$0xff]
  %v492 = vld [vmem:[%s6 + $0x60] sm:$0xff]
  %v493 = vld [vmem:[%s6 + $0x68] sm:$0xff]
  %v494 = vld [vmem:[%s6 + $0x70] sm:$0xff]
  %v495 = vld [vmem:[%s6 + $0x78] sm:$0xff]
  %496 = vmatprep.subr.mxu0 0.0
  %497 = vmatpush1.msra.mxu0 %v495
  %498 = vmatprep.subr.mxu0 0.0
  %499 = vmatpush1.msra.mxu0 %v494
  %500 = vmatprep.subr.mxu0 0.0
  %501 = vmatpush1.msra.mxu0 %v493
  %502 = vmatprep.subr.mxu0 0.0
  %503 = vmatpush1.msra.mxu0 %v492
  %504 = vmatprep.subr.mxu0 0.0
  %505 = vmatpush1.msra.mxu0 %v491
  %506 = vmatprep.subr.mxu0 0.0
  %507 = vmatpush1.msra.mxu0 %v490
  %508 = vmatprep.subr.mxu0 0.0
  %509 = vmatpush1.msra.mxu0 %v489
  %510 = vmatprep.subr.mxu0 0.0
  %511 = vmatpush1.msra.mxu0 %v488
  %512 = vmatprep.subr.mxu0 0.0
  %513 = vmatpush1.msra.mxu0 %v487
  %514 = vmatprep.subr.mxu0 0.0
  %515 = vmatpush1.msra.mxu0 %v486
  %516 = vmatprep.subr.mxu0 0.0
  %517 = vmatpush1.msra.mxu0 %v485
  %518 = vmatprep.subr.mxu0 0.0
  %519 = vmatpush1.msra.mxu0 %v484
  %520 = vmatprep.subr.mxu0 0.0
  %521 = vmatpush1.msra.mxu0 %v483
  %522 = vmatprep.subr.mxu0 0.0
  %523 = vmatpush1.msra.mxu0 %v482
  %524 = vmatprep.subr.mxu0 0.0
  %525 = vmatpush1.msra.mxu0 %v481
  %526 = vmatprep.subr.mxu0 0.0
  %527 = vmatpush1.msra.mxu0 %v480
  %528 = vmatprep.subr.mxu0 0.0
  %529 = vmatpush2.msra.mxu0 0.0
  %530 = vmatprep.subr.mxu0 0.0
  %531 = vmatpush2.msra.mxu0 0.0
  %532 = vmatprep.subr.mxu0 0.0
  %533 = vmatpush2.msra.mxu0 0.0
  %534 = vmatprep.subr.mxu0 0.0
  %535 = vmatpush2.msra.mxu0 0.0
  %536 = vmatprep.subr.mxu0 0.0
  %537 = vmatpush2.msra.mxu0 0.0
  %538 = vmatprep.subr.mxu0 0.0
  %539 = vmatpush2.msra.mxu0 0.0
  %540 = vmatprep.subr.mxu0 0.0
  %541 = vmatpush2.msra.mxu0 0.0
  %542 = vmatprep.subr.mxu0 0.0
  %543 = vmatpush2.msra.mxu0 0.0
  %544 = vmatprep.subr.mxu0 0.0
  %545 = vmatpush2.msra.mxu0 0.0
  %546 = vmatprep.subr.mxu0 0.0
  %547 = vmatpush2.msra.mxu0 0.0
  %548 = vmatprep.subr.mxu0 0.0
  %549 = vmatpush2.msra.mxu0 0.0
  %550 = vmatprep.subr.mxu0 0.0
  %551 = vmatpush2.msra.mxu0 0.0
  %552 = vmatprep.subr.mxu0 0.0
  %553 = vmatpush2.msra.mxu0 0.0
  %554 = vmatprep.subr.mxu0 0.0
  %555 = vmatpush2.msra.mxu0 0.0
  %556 = vmatprep.subr.mxu0 0.0
  %557 = vmatpush2.msra.mxu0 0.0
  %558 = vmatprep.subr.mxu0 0.0
  %559 = vmatpush2.msra.mxu0 0.0
  %560 = vmatprep.mubr.f32.mxu0 0.0
  %561 = vmatmul.mubr.f32.gmra.mxu0 %v479
  %v562 = vpop.f32.mrf.mxu0
  %v563 = vadd.f32 0.0, %v562
  %v564 = vpop.f32.mrf.mxu0
  %565 = vdwg.mxu0
  %v566 = vld [vmem:[%s7] sm:$0xff]
  %vm567 = vcmask 64512
  %v569 = vsel %vm567, %v563, 0
  %571 = vmatprep.subr.mxu0 0.0
  %572 = vmatpush1.msra.mxu0 0.0
  %573 = vmatprep.subr.mxu0 0.0
  %574 = vmatpush1.msra.mxu0 0.0
  %575 = vmatprep.subr.mxu0 0.0
  %576 = vmatpush1.msra.mxu0 0.0
  %577 = vmatprep.subr.mxu0 0.0
  %578 = vmatpush1.msra.mxu0 0.0
  %579 = vmatprep.subr.mxu0 0.0
  %580 = vmatpush1.msra.mxu0 0.0
  %581 = vmatprep.subr.mxu0 0.0
  %582 = vmatpush1.msra.mxu0 0.0
  %583 = vmatprep.subr.mxu0 0.0
  %584 = vmatpush1.msra.mxu0 0.0
  %585 = vmatprep.subr.mxu0 0.0
  %586 = vmatpush1.msra.mxu0 0.0
  %587 = vmatprep.subr.mxu0 0.0
  %588 = vmatpush1.msra.mxu0 0.0
  %589 = vmatprep.subr.mxu0 0.0
  %590 = vmatpush1.msra.mxu0 0.0
  %591 = vmatprep.subr.mxu0 0.0
  %592 = vmatpush1.msra.mxu0 0.0
  %593 = vmatprep.subr.mxu0 0.0
  %594 = vmatpush1.msra.mxu0 0.0
  %595 = vmatprep.subr.mxu0 0.0
  %596 = vmatpush1.msra.mxu0 0.0
  %597 = vmatprep.subr.mxu0 0.0
  %598 = vmatpush1.msra.mxu0 0.0
  %599 = vmatprep.subr.mxu0 0.0
  %600 = vmatpush1.msra.mxu0 0.0
  %601 = vmatprep.subr.mxu0 0.0
  %602 = vmatpush1.msra.mxu0 %v566
  %603 = vmatprep.subr.mxu0 0.0
  %604 = vmatpush2.msra.mxu0 0.0
  %605 = vmatprep.subr.mxu0 0.0
  %606 = vmatpush2.msra.mxu0 0.0
  %607 = vmatprep.subr.mxu0 0.0
  %608 = vmatpush2.msra.mxu0 0.0
  %609 = vmatprep.subr.mxu0 0.0
  %610 = vmatpush2.msra.mxu0 0.0
  %611 = vmatprep.subr.mxu0 0.0
  %612 = vmatpush2.msra.mxu0 0.0
  %613 = vmatprep.subr.mxu0 0.0
  %614 = vmatpush2.msra.mxu0 0.0
  %615 = vmatprep.subr.mxu0 0.0
  %616 = vmatpush2.msra.mxu0 0.0
  %617 = vmatprep.subr.mxu0 0.0
  %618 = vmatpush2.msra.mxu0 0.0
  %619 = vmatprep.subr.mxu0 0.0
  %620 = vmatpush2.msra.mxu0 0.0
  %621 = vmatprep.subr.mxu0 0.0
  %622 = vmatpush2.msra.mxu0 0.0
  %623 = vmatprep.subr.mxu0 0.0
  %624 = vmatpush2.msra.mxu0 0.0
  %625 = vmatprep.subr.mxu0 0.0
  %626 = vmatpush2.msra.mxu0 0.0
  %627 = vmatprep.subr.mxu0 0.0
  %628 = vmatpush2.msra.mxu0 0.0
  %629 = vmatprep.subr.mxu0 0.0
  %630 = vmatpush2.msra.mxu0 0.0
  %631 = vmatprep.subr.mxu0 0.0
  %632 = vmatpush2.msra.mxu0 0.0
  %633 = vmatprep.subr.mxu0 0.0
  %634 = vmatpush2.msra.mxu0 0.0
  %635 = vmatprep.mubr.f32.mxu0 0.0
  %636 = vmatmul.mubr.f32.gmra.mxu0 %v569
  %v637 = vpop.f32.mrf.mxu0
  %v638 = vadd.f32 0.0, %v637
  %v639 = vpop.f32.mrf.mxu0
  %640 = vdwg.mxu0
  %v641 = vmul.f32 %v638, 0.001953125
  %v642 = vmul.f32 %v641, %v641
  %v644 = vrot.slane %v642, 7
  %v646 = vsub.f32 %v641, %v644
  %v647 = vld [vmem:[%s10] sm:$0x1]
  %v648 = vadd.f32 %v646, 1e-05
  %v649 = vrsqrt.pop %v648
  %v652 = vunpack.c.l.s4 1966171168
  %v653 = vunpack.c.0.s8 %v652
  %v654 = vlaneseq
  %v655 = vshrl.u32 %v654, 7
  %v656 = vsub.s32 %v653, %v655
  %v657 = vrot.slane %v649, %v656
  %v658 = vcombine.high %v657, %v657
  %v660 = vunpack.c.l.s4 1966171168
  %v661 = vunpack.c.0.s8 %v660
  %v662 = vlaneseq
  %v663 = vshrl.u32 %v662, 7
  %v664 = vsub.s32 %v661, %v663
  %v665 = vrot.slane %v658, %v664
  %v667 = vmul.f32 %v647, %v665
  %v669 = vlaneseq
  %v670 = vshrl.u32 %v669, 7
  %v671 = vsub.s32 0, %v670
  %v672 = vrot.slane %v667, %v671
  %v674 = vmul.f32 %v442, %v672
  %v675 = vmul.f32 %v445, %v672
  %v676 = vmul.f32 %v450, %v672
  %v677 = vmul.f32 %v453, %v672
  %v678 = vld [vmem:[%s11] sm:$0x1]
  %v679 = vmul.f32 %v641, %v667
  %v680 = vsub.f32 %v678, %v679
  %v682 = vlaneseq
  %v683 = vshrl.u32 %v682, 7
  %v684 = vsub.s32 0, %v683
  %v685 = vrot.slane %v680, %v684
  %v687 = vadd.f32 %v674, %v685
  %v688 = vadd.f32 %v675, %v685
  %v689 = vadd.f32 %v676, %v685
  %v690 = vadd.f32 %v677, %v685
  %v691 = vlaneseq
  %v692 = vshrl.u32 %v691, 7
  %v693 = vadd.s32 %v692, 8
  %v694 = vpack.c.bf16 %v688, %v687
  %v695 = vpack.c.bf16 %v690, %v689
  %vm696 = vcmp.ge.s32.totalorder %v692, 4
  %vm697 = vcmp.ge.s32.totalorder %v693, 4
  %v698 = vrot.slane %v687, 4
  %v699 = vrot.slane %v688, 4
  %v700 = vrot.slane %v689, 4
  %v701 = vrot.slane %v690, 4
  %vm702 = vcmp.lt.s32.totalorder %v692, 4
  %v703 = vsel %vm702, %v700, %v701
  %v704 = vsel %vm702, %v699, %v700
  %v705 = vsel %vm702, %v698, %v699
  %v706 = vsel %vm702, %v701, %v698
  %v707 = vsel %vm696, %v706, 0.0
  %v708 = vsel %vm697, %v705, 0.0
  %v709 = vsel %vm696, %v704, 0.0
  %v710 = vsel %vm697, %v703, 0.0
  %v711 = vpack.c.bf16 %v708, %v707
  %v712 = vpack.c.bf16 %v710, %v709
  %vm713 = vcmp.lt.s32.totalorder %v692, 12
  %vm714 = vcmp.lt.s32.totalorder %v693, 12
  %v715 = vsel %vm713, %v705, 0.0
  %v716 = vsel %vm714, %v704, 0.0
  %v717 = vsel %vm713, %v703, 0.0
  %v718 = vsel %vm714, %v706, 0.0
  %v719 = vpack.c.bf16 %v716, %v715
  %v720 = vpack.c.bf16 %v718, %v717
  %v721 = vld [vmem:[%s2] sm:$0xf]
  %v722 = vld [vmem:[%s2 + $0x4] sm:$0xf]
  %v723 = vld [vmem:[%s2 + $0x8] sm:$0xf]
  %v724 = vld [vmem:[%s2 + $0xc] sm:$0xf]
  %v725 = vld [vmem:[%s2 + $0x10] sm:$0xf]
  %v726 = vld [vmem:[%s2 + $0x14] sm:$0xf]
  %v727 = vld [vmem:[%s2 + $0x18] sm:$0xf]
  %v728 = vld [vmem:[%s2 + $0x1c] sm:$0xf]
  %v729 = vld [vmem:[%s2 + $0x20] sm:$0xf]
  %v730 = vld [vmem:[%s2 + $0x24] sm:$0xf]
  %v731 = vld [vmem:[%s2 + $0x28] sm:$0xf]
  %v732 = vld [vmem:[%s2 + $0x2c] sm:$0xf]
  %v733 = vld [vmem:[%s2 + $0x30] sm:$0xf]
  %v734 = vld [vmem:[%s2 + $0x34] sm:$0xf]
  %v735 = vld [vmem:[%s2 + $0x38] sm:$0xf]
  %v736 = vld [vmem:[%s2 + $0x3c] sm:$0xf]
  %v737 = vld [vmem:[%s3] sm:$0xf]
  %v738 = vld [vmem:[%s3 + $0x4] sm:$0xf]
  %v739 = vld [vmem:[%s3 + $0x8] sm:$0xf]
  %v740 = vld [vmem:[%s3 + $0xc] sm:$0xf]
  %v741 = vld [vmem:[%s3 + $0x10] sm:$0xf]
  %v742 = vld [vmem:[%s3 + $0x14] sm:$0xf]
  %v743 = vld [vmem:[%s3 + $0x18] sm:$0xf]
  %v744 = vld [vmem:[%s3 + $0x1c] sm:$0xf]
  %v745 = vld [vmem:[%s3 + $0x20] sm:$0xf]
  %v746 = vld [vmem:[%s3 + $0x24] sm:$0xf]
  %v747 = vld [vmem:[%s3 + $0x28] sm:$0xf]
  %v748 = vld [vmem:[%s3 + $0x2c] sm:$0xf]
  %v749 = vld [vmem:[%s3 + $0x30] sm:$0xf]
  %v750 = vld [vmem:[%s3 + $0x34] sm:$0xf]
  %v751 = vld [vmem:[%s3 + $0x38] sm:$0xf]
  %v752 = vld [vmem:[%s3 + $0x3c] sm:$0xf]
  %v769 = vunpack.c.l.b16 %v737
  %v770 = vunpack.c.l.b16 %v738
  %v771 = vunpack.c.l.b16 %v739
  %v772 = vunpack.c.l.b16 %v740
  %v773 = vunpack.c.l.b16 %v741
  %v774 = vunpack.c.l.b16 %v742
  %v775 = vunpack.c.l.b16 %v743
  %v776 = vunpack.c.l.b16 %v744
  %v777 = vunpack.c.l.b16 %v745
  %v778 = vunpack.c.l.b16 %v746
  %v779 = vunpack.c.l.b16 %v747
  %v780 = vunpack.c.l.b16 %v748
  %v781 = vunpack.c.l.b16 %v749
  %v782 = vunpack.c.l.b16 %v750
  %v783 = vunpack.c.l.b16 %v751
  %v784 = vunpack.c.l.b16 %v752
  %v785 = vpack.c.b16 %v770, %v769
  %v786 = vpack.c.b16 %v772, %v771
  %v787 = vpack.c.b16 %v774, %v773
  %v788 = vpack.c.b16 %v776, %v775
  %v789 = vpack.c.b16 %v778, %v777
  %v790 = vpack.c.b16 %v780, %v779
  %v791 = vpack.c.b16 %v782, %v781
  %v792 = vpack.c.b16 %v784, %v783
  %801 = vmatprep.subr.bf16.mxu0 0
  %802 = vmatpush1.bf16.msra.mxu0 %v792
  %803 = vmatprep.subr.bf16.mxu0 0
  %804 = vmatpush1.bf16.msra.mxu0 %v791
  %805 = vmatprep.subr.bf16.mxu0 0
  %806 = vmatpush1.bf16.msra.mxu0 %v790
  %807 = vmatprep.subr.bf16.mxu0 0
  %808 = vmatpush1.bf16.msra.mxu0 %v789
  %809 = vmatprep.subr.bf16.mxu0 0
  %810 = vmatpush1.bf16.msra.mxu0 %v788
  %811 = vmatprep.subr.bf16.mxu0 0
  %812 = vmatpush1.bf16.msra.mxu0 %v787
  %813 = vmatprep.subr.bf16.mxu0 0
  %814 = vmatpush1.bf16.msra.mxu0 %v786
  %815 = vmatprep.subr.bf16.mxu0 0
  %816 = vmatpush1.bf16.msra.mxu0 %v785
  %817 = vmatprep.subr.bf16.mxu0 0
  %818 = vmatpush2.bf16.msra.mxu0 0
  %819 = vmatprep.subr.bf16.mxu0 0
  %820 = vmatpush2.bf16.msra.mxu0 0
  %821 = vmatprep.subr.bf16.mxu0 0
  %822 = vmatpush2.bf16.msra.mxu0 0
  %823 = vmatprep.subr.bf16.mxu0 0
  %824 = vmatpush2.bf16.msra.mxu0 0
  %825 = vmatprep.subr.bf16.mxu0 0
  %826 = vmatpush2.bf16.msra.mxu0 0
  %827 = vmatprep.subr.bf16.mxu0 0
  %828 = vmatpush2.bf16.msra.mxu0 0
  %829 = vmatprep.subr.bf16.mxu0 0
  %830 = vmatpush2.bf16.msra.mxu0 0
  %831 = vmatprep.subr.bf16.mxu0 0
  %832 = vmatpush2.bf16.msra.mxu0 0
  %833 = vmatprep.mubr.bf16.mxu0 0
  %834 = vmatmul.mubr.bf16.gmra.mxu0 %v694
  %v835 = vpop.f32.mrf.mxu0
  %v836 = vadd.f32 0.0, %v835
  %v837 = vpop.f32.mrf.mxu0
  %v838 = vpop.f32.mrf.mxu0
  %v839 = vadd.f32 0.0, %v838
  %v840 = vpop.f32.mrf.mxu0
  %841 = vmatprep.mubr.bf16.mxu0 0
  %842 = vmatmul.mubr.bf16.gmra.mxu0 %v695
  %v843 = vpop.f32.mrf.mxu0
  %v844 = vadd.f32 0.0, %v843
  %v845 = vpop.f32.mrf.mxu0
  %v846 = vpop.f32.mrf.mxu0
  %v847 = vadd.f32 0.0, %v846
  %v848 = vpop.f32.mrf.mxu0
  %849 = vdwg.mxu0
  %v866 = vunpack.c.l.b16 %v721
  %v867 = vunpack.c.l.b16 %v722
  %v868 = vunpack.c.l.b16 %v723
  %v869 = vunpack.c.l.b16 %v724
  %v870 = vunpack.c.l.b16 %v725
  %v871 = vunpack.c.l.b16 %v726
  %v872 = vunpack.c.l.b16 %v727
  %v873 = vunpack.c.l.b16 %v728
  %v874 = vunpack.c.l.b16 %v729
  %v875 = vunpack.c.l.b16 %v730
  %v876 = vunpack.c.l.b16 %v731
  %v877 = vunpack.c.l.b16 %v732
  %v878 = vunpack.c.l.b16 %v733
  %v879 = vunpack.c.l.b16 %v734
  %v880 = vunpack.c.l.b16 %v735
  %v881 = vunpack.c.l.b16 %v736
  %v882 = vpack.c.b16 %v867, %v866
  %v883 = vpack.c.b16 %v869, %v868
  %v884 = vpack.c.b16 %v871, %v870
  %v885 = vpack.c.b16 %v873, %v872
  %v886 = vpack.c.b16 %v875, %v874
  %v887 = vpack.c.b16 %v877, %v876
  %v888 = vpack.c.b16 %v879, %v878
  %v889 = vpack.c.b16 %v881, %v880
  %898 = vmatprep.subr.bf16.mxu0 0
  %899 = vmatpush1.bf16.msra.mxu0 %v889
  %900 = vmatprep.subr.bf16.mxu0 0
  %901 = vmatpush1.bf16.msra.mxu0 %v888
  %902 = vmatprep.subr.bf16.mxu0 0
  %903 = vmatpush1.bf16.msra.mxu0 %v887
  %904 = vmatprep.subr.bf16.mxu0 0
  %905 = vmatpush1.bf16.msra.mxu0 %v886
  %906 = vmatprep.subr.bf16.mxu0 0
  %907 = vmatpush1.bf16.msra.mxu0 %v885
  %908 = vmatprep.subr.bf16.mxu0 0
  %909 = vmatpush1.bf16.msra.mxu0 %v884
  %910 = vmatprep.subr.bf16.mxu0 0
  %911 = vmatpush1.bf16.msra.mxu0 %v883
  %912 = vmatprep.subr.bf16.mxu0 0
  %913 = vmatpush1.bf16.msra.mxu0 %v882
  %914 = vmatprep.subr.bf16.mxu0 0
  %915 = vmatpush2.bf16.msra.mxu0 0
  %916 = vmatprep.subr.bf16.mxu0 0
  %917 = vmatpush2.bf16.msra.mxu0 0
  %918 = vmatprep.subr.bf16.mxu0 0
  %919 = vmatpush2.bf16.msra.mxu0 0
  %920 = vmatprep.subr.bf16.mxu0 0
  %921 = vmatpush2.bf16.msra.mxu0 0
  %922 = vmatprep.subr.bf16.mxu0 0
  %923 = vmatpush2.bf16.msra.mxu0 0
  %924 = vmatprep.subr.bf16.mxu0 0
  %925 = vmatpush2.bf16.msra.mxu0 0
  %926 = vmatprep.subr.bf16.mxu0 0
  %927 = vmatpush2.bf16.msra.mxu0 0
  %928 = vmatprep.subr.bf16.mxu0 0
  %929 = vmatpush2.bf16.msra.mxu0 0
  %930 = vmatprep.mubr.bf16.mxu0 0
  %931 = vmatmul.mubr.bf16.gmra.mxu0 %v711
  %v932 = vpop.f32.mrf.mxu0
  %v933 = vadd.f32 %v836, %v932
  %v934 = vpop.f32.mrf.mxu0
  %v935 = vpop.f32.mrf.mxu0
  %v936 = vadd.f32 %v839, %v935
  %v937 = vpop.f32.mrf.mxu0
  %938 = vmatprep.mubr.bf16.mxu0 0
  %939 = vmatmul.mubr.bf16.gmra.mxu0 %v712
  %v940 = vpop.f32.mrf.mxu0
  %v941 = vadd.f32 %v844, %v940
  %v942 = vpop.f32.mrf.mxu0
  %v943 = vpop.f32.mrf.mxu0
  %v944 = vadd.f32 %v847, %v943
  %v945 = vpop.f32.mrf.mxu0
  %946 = vdwg.mxu0
  %v947 = vld [vmem:[%s4] sm:$0xf]
  %v948 = vld [vmem:[%s4 + $0x4] sm:$0xf]
  %v949 = vld [vmem:[%s4 + $0x8] sm:$0xf]
  %v950 = vld [vmem:[%s4 + $0xc] sm:$0xf]
  %v951 = vld [vmem:[%s4 + $0x10] sm:$0xf]
  %v952 = vld [vmem:[%s4 + $0x14] sm:$0xf]
  %v953 = vld [vmem:[%s4 + $0x18] sm:$0xf]
  %v954 = vld [vmem:[%s4 + $0x1c] sm:$0xf]
  %v955 = vld [vmem:[%s4 + $0x20] sm:$0xf]
  %v956 = vld [vmem:[%s4 + $0x24] sm:$0xf]
  %v957 = vld [vmem:[%s4 + $0x28] sm:$0xf]
  %v958 = vld [vmem:[%s4 + $0x2c] sm:$0xf]
  %v959 = vld [vmem:[%s4 + $0x30] sm:$0xf]
  %v960 = vld [vmem:[%s4 + $0x34] sm:$0xf]
  %v961 = vld [vmem:[%s4 + $0x38] sm:$0xf]
  %v962 = vld [vmem:[%s4 + $0x3c] sm:$0xf]
  %v979 = vunpack.c.l.b16 %v947
  %v980 = vunpack.c.l.b16 %v948
  %v981 = vunpack.c.l.b16 %v949
  %v982 = vunpack.c.l.b16 %v950
  %v983 = vunpack.c.l.b16 %v951
  %v984 = vunpack.c.l.b16 %v952
  %v985 = vunpack.c.l.b16 %v953
  %v986 = vunpack.c.l.b16 %v954
  %v987 = vunpack.c.l.b16 %v955
  %v988 = vunpack.c.l.b16 %v956
  %v989 = vunpack.c.l.b16 %v957
  %v990 = vunpack.c.l.b16 %v958
  %v991 = vunpack.c.l.b16 %v959
  %v992 = vunpack.c.l.b16 %v960
  %v993 = vunpack.c.l.b16 %v961
  %v994 = vunpack.c.l.b16 %v962
  %v995 = vpack.c.b16 %v980, %v979
  %v996 = vpack.c.b16 %v982, %v981
  %v997 = vpack.c.b16 %v984, %v983
  %v998 = vpack.c.b16 %v986, %v985
  %v999 = vpack.c.b16 %v988, %v987
  %v1000 = vpack.c.b16 %v990, %v989
  %v1001 = vpack.c.b16 %v992, %v991
  %v1002 = vpack.c.b16 %v994, %v993
  %1011 = vmatprep.subr.bf16.mxu0 0
  %1012 = vmatpush1.bf16.msra.mxu0 %v1002
  %1013 = vmatprep.subr.bf16.mxu0 0
  %1014 = vmatpush1.bf16.msra.mxu0 %v1001
  %1015 = vmatprep.subr.bf16.mxu0 0
  %1016 = vmatpush1.bf16.msra.mxu0 %v1000
  %1017 = vmatprep.subr.bf16.mxu0 0
  %1018 = vmatpush1.bf16.msra.mxu0 %v999
  %1019 = vmatprep.subr.bf16.mxu0 0
  %1020 = vmatpush1.bf16.msra.mxu0 %v998
  %1021 = vmatprep.subr.bf16.mxu0 0
  %1022 = vmatpush1.bf16.msra.mxu0 %v997
  %1023 = vmatprep.subr.bf16.mxu0 0
  %1024 = vmatpush1.bf16.msra.mxu0 %v996
  %1025 = vmatprep.subr.bf16.mxu0 0
  %1026 = vmatpush1.bf16.msra.mxu0 %v995
  %1027 = vmatprep.subr.bf16.mxu0 0
  %1028 = vmatpush2.bf16.msra.mxu0 0
  %1029 = vmatprep.subr.bf16.mxu0 0
  %1030 = vmatpush2.bf16.msra.mxu0 0
  %1031 = vmatprep.subr.bf16.mxu0 0
  %1032 = vmatpush2.bf16.msra.mxu0 0
  %1033 = vmatprep.subr.bf16.mxu0 0
  %1034 = vmatpush2.bf16.msra.mxu0 0
  %1035 = vmatprep.subr.bf16.mxu0 0
  %1036 = vmatpush2.bf16.msra.mxu0 0
  %1037 = vmatprep.subr.bf16.mxu0 0
  %1038 = vmatpush2.bf16.msra.mxu0 0
  %1039 = vmatprep.subr.bf16.mxu0 0
  %1040 = vmatpush2.bf16.msra.mxu0 0
  %1041 = vmatprep.subr.bf16.mxu0 0
  %1042 = vmatpush2.bf16.msra.mxu0 0
  %1043 = vmatprep.mubr.bf16.mxu0 0
  %1044 = vmatmul.mubr.bf16.gmra.mxu0 %v719
  %v1045 = vpop.f32.mrf.mxu0
  %v1046 = vadd.f32 0.0, %v1045
  %v1047 = vpop.f32.mrf.mxu0
  %v1048 = vpop.f32.mrf.mxu0
  %v1049 = vadd.f32 0.0, %v1048
  %v1050 = vpop.f32.mrf.mxu0
  %1051 = vmatprep.mubr.bf16.mxu0 0
  %1052 = vmatmul.mubr.bf16.gmra.mxu0 %v720
  %v1053 = vpop.f32.mrf.mxu0
  %v1054 = vadd.f32 0.0, %v1053
  %v1055 = vpop.f32.mrf.mxu0
  %v1056 = vpop.f32.mrf.mxu0
  %v1057 = vadd.f32 0.0, %v1056
  %v1058 = vpop.f32.mrf.mxu0
  %1059 = vdwg.mxu0
  %v1060 = vadd.f32 %v933, %v1046
  %v1061 = vadd.f32 %v936, %v1049
  %v1062 = vadd.f32 %v941, %v1054
  %v1063 = vadd.f32 %v944, %v1057
  %v1064 = vadd.f32 %v1060, %v1061
  %v1065 = vadd.f32 %v1064, %v1062
  %v1066 = vadd.f32 %v1065, %v1063
  %v1067 = vrot.slane %v1066, 4
  %v1068 = vadd.f32 %v1066, %v1067
  %v1069 = vrot.slane %v1068, 2
  %v1070 = vadd.f32 %v1068, %v1069
  %v1071 = vrot.slane %v1070, 1
  %v1072 = vadd.f32 %v1070, %v1071
  %v1073 = vmul.f32 %v1060, %v1060
  %v1074 = vmul.f32 %v1061, %v1061
  %v1075 = vmul.f32 %v1062, %v1062
  %v1076 = vmul.f32 %v1063, %v1063
  %v1077 = vadd.f32 %v1073, %v1074
  %v1078 = vadd.f32 %v1077, %v1075
  %v1079 = vadd.f32 %v1078, %v1076
  %v1080 = vrot.slane %v1079, 4
  %v1081 = vadd.f32 %v1079, %v1080
  %v1082 = vrot.slane %v1081, 2
  %v1083 = vadd.f32 %v1081, %v1082
  %v1084 = vrot.slane %v1083, 1
  %v1085 = vadd.f32 %v1083, %v1084
  %v1086 = vsel %vm478, %v1072, %v1085
  %1087 = vmatprep.subr.mxu0 0.0
  %1088 = vmatpush1.msra.mxu0 %v495
  %1089 = vmatprep.subr.mxu0 0.0
  %1090 = vmatpush1.msra.mxu0 %v494
  %1091 = vmatprep.subr.mxu0 0.0
  %1092 = vmatpush1.msra.mxu0 %v493
  %1093 = vmatprep.subr.mxu0 0.0
  %1094 = vmatpush1.msra.mxu0 %v492
  %1095 = vmatprep.subr.mxu0 0.0
  %1096 = vmatpush1.msra.mxu0 %v491
  %1097 = vmatprep.subr.mxu0 0.0
  %1098 = vmatpush1.msra.mxu0 %v490
  %1099 = vmatprep.subr.mxu0 0.0
  %1100 = vmatpush1.msra.mxu0 %v489
  %1101 = vmatprep.subr.mxu0 0.0
  %1102 = vmatpush1.msra.mxu0 %v488
  %1103 = vmatprep.subr.mxu0 0.0
  %1104 = vmatpush1.msra.mxu0 %v487
  %1105 = vmatprep.subr.mxu0 0.0
  %1106 = vmatpush1.msra.mxu0 %v486
  %1107 = vmatprep.subr.mxu0 0.0
  %1108 = vmatpush1.msra.mxu0 %v485
  %1109 = vmatprep.subr.mxu0 0.0
  %1110 = vmatpush1.msra.mxu0 %v484
  %1111 = vmatprep.subr.mxu0 0.0
  %1112 = vmatpush1.msra.mxu0 %v483
  %1113 = vmatprep.subr.mxu0 0.0
  %1114 = vmatpush1.msra.mxu0 %v482
  %1115 = vmatprep.subr.mxu0 0.0
  %1116 = vmatpush1.msra.mxu0 %v481
  %1117 = vmatprep.subr.mxu0 0.0
  %1118 = vmatpush1.msra.mxu0 %v480
  %1119 = vmatprep.subr.mxu0 0.0
  %1120 = vmatpush2.msra.mxu0 0.0
  %1121 = vmatprep.subr.mxu0 0.0
  %1122 = vmatpush2.msra.mxu0 0.0
  %1123 = vmatprep.subr.mxu0 0.0
  %1124 = vmatpush2.msra.mxu0 0.0
  %1125 = vmatprep.subr.mxu0 0.0
  %1126 = vmatpush2.msra.mxu0 0.0
  %1127 = vmatprep.subr.mxu0 0.0
  %1128 = vmatpush2.msra.mxu0 0.0
  %1129 = vmatprep.subr.mxu0 0.0
  %1130 = vmatpush2.msra.mxu0 0.0
  %1131 = vmatprep.subr.mxu0 0.0
  %1132 = vmatpush2.msra.mxu0 0.0
  %1133 = vmatprep.subr.mxu0 0.0
  %1134 = vmatpush2.msra.mxu0 0.0
  %1135 = vmatprep.subr.mxu0 0.0
  %1136 = vmatpush2.msra.mxu0 0.0
  %1137 = vmatprep.subr.mxu0 0.0
  %1138 = vmatpush2.msra.mxu0 0.0
  %1139 = vmatprep.subr.mxu0 0.0
  %1140 = vmatpush2.msra.mxu0 0.0
  %1141 = vmatprep.subr.mxu0 0.0
  %1142 = vmatpush2.msra.mxu0 0.0
  %1143 = vmatprep.subr.mxu0 0.0
  %1144 = vmatpush2.msra.mxu0 0.0
  %1145 = vmatprep.subr.mxu0 0.0
  %1146 = vmatpush2.msra.mxu0 0.0
  %1147 = vmatprep.subr.mxu0 0.0
  %1148 = vmatpush2.msra.mxu0 0.0
  %1149 = vmatprep.subr.mxu0 0.0
  %1150 = vmatpush2.msra.mxu0 0.0
  %1151 = vmatprep.mubr.f32.mxu0 0.0
  %1152 = vmatmul.mubr.f32.gmra.mxu0 %v1086
  %v1153 = vpop.f32.mrf.mxu0
  %v1154 = vadd.f32 0.0, %v1153
  %v1155 = vpop.f32.mrf.mxu0
  %1156 = vdwg.mxu0
  %v1158 = vsel %vm567, %v1154, 0
  %1160 = vmatprep.subr.mxu0 0.0
  %1161 = vmatpush1.msra.mxu0 0.0
  %1162 = vmatprep.subr.mxu0 0.0
  %1163 = vmatpush1.msra.mxu0 0.0
  %1164 = vmatprep.subr.mxu0 0.0
  %1165 = vmatpush1.msra.mxu0 0.0
  %1166 = vmatprep.subr.mxu0 0.0
  %1167 = vmatpush1.msra.mxu0 0.0
  %1168 = vmatprep.subr.mxu0 0.0
  %1169 = vmatpush1.msra.mxu0 0.0
  %1170 = vmatprep.subr.mxu0 0.0
  %1171 = vmatpush1.msra.mxu0 0.0
  %1172 = vmatprep.subr.mxu0 0.0
  %1173 = vmatpush1.msra.mxu0 0.0
  %1174 = vmatprep.subr.mxu0 0.0
  %1175 = vmatpush1.msra.mxu0 0.0
  %1176 = vmatprep.subr.mxu0 0.0
  %1177 = vmatpush1.msra.mxu0 0.0
  %1178 = vmatprep.subr.mxu0 0.0
  %1179 = vmatpush1.msra.mxu0 0.0
  %1180 = vmatprep.subr.mxu0 0.0
  %1181 = vmatpush1.msra.mxu0 0.0
  %1182 = vmatprep.subr.mxu0 0.0
  %1183 = vmatpush1.msra.mxu0 0.0
  %1184 = vmatprep.subr.mxu0 0.0
  %1185 = vmatpush1.msra.mxu0 0.0
  %1186 = vmatprep.subr.mxu0 0.0
  %1187 = vmatpush1.msra.mxu0 0.0
  %1188 = vmatprep.subr.mxu0 0.0
  %1189 = vmatpush1.msra.mxu0 0.0
  %1190 = vmatprep.subr.mxu0 0.0
  %1191 = vmatpush1.msra.mxu0 %v566
  %1192 = vmatprep.subr.mxu0 0.0
  %1193 = vmatpush2.msra.mxu0 0.0
  %1194 = vmatprep.subr.mxu0 0.0
  %1195 = vmatpush2.msra.mxu0 0.0
  %1196 = vmatprep.subr.mxu0 0.0
  %1197 = vmatpush2.msra.mxu0 0.0
  %1198 = vmatprep.subr.mxu0 0.0
  %1199 = vmatpush2.msra.mxu0 0.0
  %1200 = vmatprep.subr.mxu0 0.0
  %1201 = vmatpush2.msra.mxu0 0.0
  %1202 = vmatprep.subr.mxu0 0.0
  %1203 = vmatpush2.msra.mxu0 0.0
  %1204 = vmatprep.subr.mxu0 0.0
  %1205 = vmatpush2.msra.mxu0 0.0
  %1206 = vmatprep.subr.mxu0 0.0
  %1207 = vmatpush2.msra.mxu0 0.0
  %1208 = vmatprep.subr.mxu0 0.0
  %1209 = vmatpush2.msra.mxu0 0.0
  %1210 = vmatprep.subr.mxu0 0.0
  %1211 = vmatpush2.msra.mxu0 0.0
  %1212 = vmatprep.subr.mxu0 0.0
  %1213 = vmatpush2.msra.mxu0 0.0
  %1214 = vmatprep.subr.mxu0 0.0
  %1215 = vmatpush2.msra.mxu0 0.0
  %1216 = vmatprep.subr.mxu0 0.0
  %1217 = vmatpush2.msra.mxu0 0.0
  %1218 = vmatprep.subr.mxu0 0.0
  %1219 = vmatpush2.msra.mxu0 0.0
  %1220 = vmatprep.subr.mxu0 0.0
  %1221 = vmatpush2.msra.mxu0 0.0
  %1222 = vmatprep.subr.mxu0 0.0
  %1223 = vmatpush2.msra.mxu0 0.0
  %1224 = vmatprep.mubr.f32.mxu0 0.0
  %1225 = vmatmul.mubr.f32.gmra.mxu0 %v1158
  %v1226 = vpop.f32.mrf.mxu0
  %v1227 = vadd.f32 0.0, %v1226
  %v1228 = vpop.f32.mrf.mxu0
  %1229 = vdwg.mxu0
  %v1230 = vmul.f32 %v1227, 0.001953125
  %v1231 = vmul.f32 %v1230, %v1230
  %v1233 = vrot.slane %v1231, 7
  %v1235 = vsub.f32 %v1230, %v1233
  %v1236 = vld [vmem:[%s12] sm:$0x1]
  %v1237 = vadd.f32 %v1235, 1e-05
  %v1238 = vrsqrt.pop %v1237
  %v1241 = vunpack.c.l.s4 1966171168
  %v1242 = vunpack.c.0.s8 %v1241
  %v1243 = vlaneseq
  %v1244 = vshrl.u32 %v1243, 7
  %v1245 = vsub.s32 %v1242, %v1244
  %v1246 = vrot.slane %v1238, %v1245
  %v1247 = vcombine.high %v1246, %v1246
  %v1249 = vunpack.c.l.s4 1966171168
  %v1250 = vunpack.c.0.s8 %v1249
  %v1251 = vlaneseq
  %v1252 = vshrl.u32 %v1251, 7
  %v1253 = vsub.s32 %v1250, %v1252
  %v1254 = vrot.slane %v1247, %v1253
  %v1256 = vmul.f32 %v1236, %v1254
  %v1258 = vlaneseq
  %v1259 = vshrl.u32 %v1258, 7
  %v1260 = vsub.s32 0, %v1259
  %v1261 = vrot.slane %v1256, %v1260
  %v1263 = vmul.f32 %v1060, %v1261
  %v1264 = vmul.f32 %v1061, %v1261
  %v1265 = vmul.f32 %v1062, %v1261
  %v1266 = vmul.f32 %v1063, %v1261
  %v1267 = vld [vmem:[%s13] sm:$0x1]
  %v1268 = vmul.f32 %v1230, %v1256
  %v1269 = vsub.f32 %v1267, %v1268
  %v1271 = vlaneseq
  %v1272 = vshrl.u32 %v1271, 7
  %v1273 = vsub.s32 0, %v1272
  %v1274 = vrot.slane %v1269, %v1273
  %v1276 = vadd.f32 %v1263, %v1274
  %v1277 = vadd.f32 %v1264, %v1274
  %v1278 = vadd.f32 %v1265, %v1274
  %v1279 = vadd.f32 %v1266, %v1274
  %v1280 = vadd.f32 %v687, %v1276
  %v1281 = vadd.f32 %v688, %v1277
  %v1282 = vadd.f32 %v689, %v1278
  %v1283 = vadd.f32 %v690, %v1279
  %v1284 = vpack.c.bf16 %v1281, %v1280
  %v1285 = vpack.c.bf16 %v1283, %v1282
  %v1286 = vld [vmem:[%s5] sm:$0xff]
  %v1287 = vld [vmem:[%s5 + $0x8] sm:$0xff]
  %v1288 = vld [vmem:[%s5 + $0x10] sm:$0xff]
  %v1289 = vld [vmem:[%s5 + $0x18] sm:$0xff]
  %v1290 = vld [vmem:[%s5 + $0x20] sm:$0xff]
  %v1291 = vld [vmem:[%s5 + $0x28] sm:$0xff]
  %v1292 = vld [vmem:[%s5 + $0x30] sm:$0xff]
  %v1293 = vld [vmem:[%s5 + $0x38] sm:$0xff]
  %v1294 = vld [vmem:[%s5 + $0x40] sm:$0xff]
  %v1295 = vld [vmem:[%s5 + $0x48] sm:$0xff]
  %v1296 = vld [vmem:[%s5 + $0x50] sm:$0xff]
  %v1297 = vld [vmem:[%s5 + $0x58] sm:$0xff]
  %v1298 = vld [vmem:[%s5 + $0x60] sm:$0xff]
  %v1299 = vld [vmem:[%s5 + $0x68] sm:$0xff]
  %v1300 = vld [vmem:[%s5 + $0x70] sm:$0xff]
  %v1301 = vld [vmem:[%s5 + $0x78] sm:$0xff]
  %v1302 = vld [vmem:[%s5 + $0x80] sm:$0xff]
  %v1303 = vld [vmem:[%s5 + $0x88] sm:$0xff]
  %v1304 = vld [vmem:[%s5 + $0x90] sm:$0xff]
  %v1305 = vld [vmem:[%s5 + $0x98] sm:$0xff]
  %v1306 = vld [vmem:[%s5 + $0xa0] sm:$0xff]
  %v1307 = vld [vmem:[%s5 + $0xa8] sm:$0xff]
  %v1308 = vld [vmem:[%s5 + $0xb0] sm:$0xff]
  %v1309 = vld [vmem:[%s5 + $0xb8] sm:$0xff]
  %v1310 = vld [vmem:[%s5 + $0xc0] sm:$0xff]
  %v1311 = vld [vmem:[%s5 + $0xc8] sm:$0xff]
  %v1312 = vld [vmem:[%s5 + $0xd0] sm:$0xff]
  %v1313 = vld [vmem:[%s5 + $0xd8] sm:$0xff]
  %v1314 = vld [vmem:[%s5 + $0xe0] sm:$0xff]
  %v1315 = vld [vmem:[%s5 + $0xe8] sm:$0xff]
  %v1316 = vld [vmem:[%s5 + $0xf0] sm:$0xff]
  %v1317 = vld [vmem:[%s5 + $0xf8] sm:$0xff]
  %v1350 = vunpack.c.l.b16 %v1286
  %v1351 = vunpack.c.h.b16 %v1286
  %v1352 = vunpack.c.l.b16 %v1287
  %v1353 = vunpack.c.h.b16 %v1287
  %v1354 = vunpack.c.l.b16 %v1288
  %v1355 = vunpack.c.h.b16 %v1288
  %v1356 = vunpack.c.l.b16 %v1289
  %v1357 = vunpack.c.h.b16 %v1289
  %v1358 = vunpack.c.l.b16 %v1290
  %v1359 = vunpack.c.h.b16 %v1290
  %v1360 = vunpack.c.l.b16 %v1291
  %v1361 = vunpack.c.h.b16 %v1291
  %v1362 = vunpack.c.l.b16 %v1292
  %v1363 = vunpack.c.h.b16 %v1292
  %v1364 = vunpack.c.l.b16 %v1293
  %v1365 = vunpack.c.h.b16 %v1293
  %v1366 = vunpack.c.l.b16 %v1294
  %v1367 = vunpack.c.h.b16 %v1294
  %v1368 = vunpack.c.l.b16 %v1295
  %v1369 = vunpack.c.h.b16 %v1295
  %v1370 = vunpack.c.l.b16 %v1296
  %v1371 = vunpack.c.h.b16 %v1296
  %v1372 = vunpack.c.l.b16 %v1297
  %v1373 = vunpack.c.h.b16 %v1297
  %v1374 = vunpack.c.l.b16 %v1298
  %v1375 = vunpack.c.h.b16 %v1298
  %v1376 = vunpack.c.l.b16 %v1299
  %v1377 = vunpack.c.h.b16 %v1299
  %v1378 = vunpack.c.l.b16 %v1300
  %v1379 = vunpack.c.h.b16 %v1300
  %v1380 = vunpack.c.l.b16 %v1301
  %v1381 = vunpack.c.h.b16 %v1301
  %v1382 = vunpack.c.l.b16 %v1302
  %v1383 = vunpack.c.h.b16 %v1302
  %v1384 = vunpack.c.l.b16 %v1303
  %v1385 = vunpack.c.h.b16 %v1303
  %v1386 = vunpack.c.l.b16 %v1304
  %v1387 = vunpack.c.h.b16 %v1304
  %v1388 = vunpack.c.l.b16 %v1305
  %v1389 = vunpack.c.h.b16 %v1305
  %v1390 = vunpack.c.l.b16 %v1306
  %v1391 = vunpack.c.h.b16 %v1306
  %v1392 = vunpack.c.l.b16 %v1307
  %v1393 = vunpack.c.h.b16 %v1307
  %v1394 = vunpack.c.l.b16 %v1308
  %v1395 = vunpack.c.h.b16 %v1308
  %v1396 = vunpack.c.l.b16 %v1309
  %v1397 = vunpack.c.h.b16 %v1309
  %v1398 = vunpack.c.l.b16 %v1310
  %v1399 = vunpack.c.h.b16 %v1310
  %v1400 = vunpack.c.l.b16 %v1311
  %v1401 = vunpack.c.h.b16 %v1311
  %v1402 = vunpack.c.l.b16 %v1312
  %v1403 = vunpack.c.h.b16 %v1312
  %v1404 = vunpack.c.l.b16 %v1313
  %v1405 = vunpack.c.h.b16 %v1313
  %v1406 = vunpack.c.l.b16 %v1314
  %v1407 = vunpack.c.h.b16 %v1314
  %v1408 = vunpack.c.l.b16 %v1315
  %v1409 = vunpack.c.h.b16 %v1315
  %v1410 = vunpack.c.l.b16 %v1316
  %v1411 = vunpack.c.h.b16 %v1316
  %v1412 = vunpack.c.l.b16 %v1317
  %v1413 = vunpack.c.h.b16 %v1317
  %v1414 = vpack.c.b16 %v1354, %v1350
  %v1415 = vpack.c.b16 %v1355, %v1351
  %v1416 = vpack.c.b16 %v1356, %v1352
  %v1417 = vpack.c.b16 %v1357, %v1353
  %v1418 = vpack.c.b16 %v1362, %v1358
  %v1419 = vpack.c.b16 %v1363, %v1359
  %v1420 = vpack.c.b16 %v1364, %v1360
  %v1421 = vpack.c.b16 %v1365, %v1361
  %v1422 = vpack.c.b16 %v1370, %v1366
  %v1423 = vpack.c.b16 %v1371, %v1367
  %v1424 = vpack.c.b16 %v1372, %v1368
  %v1425 = vpack.c.b16 %v1373, %v1369
  %v1426 = vpack.c.b16 %v1378, %v1374
  %v1427 = vpack.c.b16 %v1379, %v1375
  %v1428 = vpack.c.b16 %v1380, %v1376
  %v1429 = vpack.c.b16 %v1381, %v1377
  %v1430 = vpack.c.b16 %v1386, %v1382
  %v1431 = vpack.c.b16 %v1387, %v1383
  %v1432 = vpack.c.b16 %v1388, %v1384
  %v1433 = vpack.c.b16 %v1389, %v1385
  %v1434 = vpack.c.b16 %v1394, %v1390
  %v1435 = vpack.c.b16 %v1395, %v1391
  %v1436 = vpack.c.b16 %v1396, %v1392
  %v1437 = vpack.c.b16 %v1397, %v1393
  %v1438 = vpack.c.b16 %v1402, %v1398
  %v1439 = vpack.c.b16 %v1403, %v1399
  %v1440 = vpack.c.b16 %v1404, %v1400
  %v1441 = vpack.c.b16 %v1405, %v1401
  %v1442 = vpack.c.b16 %v1410, %v1406
  %v1443 = vpack.c.b16 %v1411, %v1407
  %v1444 = vpack.c.b16 %v1412, %v1408
  %v1445 = vpack.c.b16 %v1413, %v1409
  %1478 = vmatprep.subr.bf16.mxu0 %v1443
  %1479 = vmatpush1.bf16.msra.mxu0 %v1442
  %1480 = vmatprep.subr.bf16.mxu0 %v1439
  %1481 = vmatpush1.bf16.msra.mxu0 %v1438
  %1482 = vmatprep.subr.bf16.mxu0 %v1435
  %1483 = vmatpush1.bf16.msra.mxu0 %v1434
  %1484 = vmatprep.subr.bf16.mxu0 %v1431
  %1485 = vmatpush1.bf16.msra.mxu0 %v1430
  %1486 = vmatprep.subr.bf16.mxu0 %v1427
  %1487 = vmatpush1.bf16.msra.mxu0 %v1426
  %1488 = vmatprep.subr.bf16.mxu0 %v1423
  %1489 = vmatpush1.bf16.msra.mxu0 %v1422
  %1490 = vmatprep.subr.bf16.mxu0 %v1419
  %1491 = vmatpush1.bf16.msra.mxu0 %v1418
  %1492 = vmatprep.subr.bf16.mxu0 %v1415
  %1493 = vmatpush1.bf16.msra.mxu0 %v1414
  %1494 = vmatprep.subr.bf16.mxu0 0
  %1495 = vmatpush2.bf16.msra.mxu0 0
  %1496 = vmatprep.subr.bf16.mxu0 0
  %1497 = vmatpush2.bf16.msra.mxu0 0
  %1498 = vmatprep.subr.bf16.mxu0 0
  %1499 = vmatpush2.bf16.msra.mxu0 0
  %1500 = vmatprep.subr.bf16.mxu0 0
  %1501 = vmatpush2.bf16.msra.mxu0 0
  %1502 = vmatprep.subr.bf16.mxu0 0
  %1503 = vmatpush2.bf16.msra.mxu0 0
  %1504 = vmatprep.subr.bf16.mxu0 0
  %1505 = vmatpush2.bf16.msra.mxu0 0
  %1506 = vmatprep.subr.bf16.mxu0 0
  %1507 = vmatpush2.bf16.msra.mxu0 0
  %1508 = vmatprep.subr.bf16.mxu0 0
  %1509 = vmatpush2.bf16.msra.mxu0 0
  %1510 = vmatprep.mubr.bf16.mxu0 0
  %1511 = vmatmul.mubr.bf16.gmra.mxu0 %v1284
  %v1512 = vpop.f32.mrf.mxu0
  %v1513 = vadd.f32 0.0, %v1512
  %v1514 = vpop.f32.mrf.mxu0
  %v1515 = vadd.f32 0.0, %v1514
  %v1516 = vpop.f32.mrf.mxu0
  %v1517 = vadd.f32 0.0, %v1516
  %v1518 = vpop.f32.mrf.mxu0
  %v1519 = vadd.f32 0.0, %v1518
  %1520 = vmatprep.mubr.bf16.mxu0 0
  %1521 = vmatmul.mubr.bf16.gmra.mxu0 %v1285
  %v1522 = vpop.f32.mrf.mxu0
  %v1523 = vadd.f32 0.0, %v1522
  %v1524 = vpop.f32.mrf.mxu0
  %v1525 = vadd.f32 0.0, %v1524
  %v1526 = vpop.f32.mrf.mxu0
  %v1527 = vadd.f32 0.0, %v1526
  %v1528 = vpop.f32.mrf.mxu0
  %v1529 = vadd.f32 0.0, %v1528
  %1530 = vdwg.mxu0
  %1531 = vmatprep.subr.bf16.mxu0 %v1445
  %1532 = vmatpush1.bf16.msra.mxu0 %v1444
  %1533 = vmatprep.subr.bf16.mxu0 %v1441
  %1534 = vmatpush1.bf16.msra.mxu0 %v1440
  %1535 = vmatprep.subr.bf16.mxu0 %v1437
  %1536 = vmatpush1.bf16.msra.mxu0 %v1436
  %1537 = vmatprep.subr.bf16.mxu0 %v1433
  %1538 = vmatpush1.bf16.msra.mxu0 %v1432
  %1539 = vmatprep.subr.bf16.mxu0 %v1429
  %1540 = vmatpush1.bf16.msra.mxu0 %v1428
  %1541 = vmatprep.subr.bf16.mxu0 %v1425
  %1542 = vmatpush1.bf16.msra.mxu0 %v1424
  %1543 = vmatprep.subr.bf16.mxu0 %v1421
  %1544 = vmatpush1.bf16.msra.mxu0 %v1420
  %1545 = vmatprep.subr.bf16.mxu0 %v1417
  %1546 = vmatpush1.bf16.msra.mxu0 %v1416
  %1547 = vmatprep.subr.bf16.mxu0 0
  %1548 = vmatpush2.bf16.msra.mxu0 0
  %1549 = vmatprep.subr.bf16.mxu0 0
  %1550 = vmatpush2.bf16.msra.mxu0 0
  %1551 = vmatprep.subr.bf16.mxu0 0
  %1552 = vmatpush2.bf16.msra.mxu0 0
  %1553 = vmatprep.subr.bf16.mxu0 0
  %1554 = vmatpush2.bf16.msra.mxu0 0
  %1555 = vmatprep.subr.bf16.mxu0 0
  %1556 = vmatpush2.bf16.msra.mxu0 0
  %1557 = vmatprep.subr.bf16.mxu0 0
  %1558 = vmatpush2.bf16.msra.mxu0 0
  %1559 = vmatprep.subr.bf16.mxu0 0
  %1560 = vmatpush2.bf16.msra.mxu0 0
  %1561 = vmatprep.subr.bf16.mxu0 0
  %1562 = vmatpush2.bf16.msra.mxu0 0
  %1563 = vmatprep.mubr.bf16.mxu0 0
  %1564 = vmatmul.mubr.bf16.gmra.mxu0 %v1284
  %v1565 = vpop.f32.mrf.mxu0
  %v1566 = vadd.f32 0.0, %v1565
  %v1567 = vpop.f32.mrf.mxu0
  %v1568 = vadd.f32 0.0, %v1567
  %v1569 = vpop.f32.mrf.mxu0
  %v1570 = vadd.f32 0.0, %v1569
  %v1571 = vpop.f32.mrf.mxu0
  %v1572 = vadd.f32 0.0, %v1571
  %1573 = vmatprep.mubr.bf16.mxu0 0
  %1574 = vmatmul.mubr.bf16.gmra.mxu0 %v1285
  %v1575 = vpop.f32.mrf.mxu0
  %v1576 = vadd.f32 0.0, %v1575
  %v1577 = vpop.f32.mrf.mxu0
  %v1578 = vadd.f32 0.0, %v1577
  %v1579 = vpop.f32.mrf.mxu0
  %v1580 = vadd.f32 0.0, %v1579
  %v1581 = vpop.f32.mrf.mxu0
  %v1582 = vadd.f32 0.0, %v1581
  %1583 = vdwg.mxu0
  %v1584 = vadd.f32 %v1513, %v1517
  %v1585 = vadd.f32 %v1584, %v1523
  %v1586 = vadd.f32 %v1585, %v1527
  %v1587 = vrot.slane %v1586, 4
  %v1588 = vadd.f32 %v1586, %v1587
  %v1589 = vrot.slane %v1588, 2
  %v1590 = vadd.f32 %v1588, %v1589
  %v1591 = vrot.slane %v1590, 1
  %v1592 = vadd.f32 %v1590, %v1591
  %v1593 = vadd.f32 %v1515, %v1519
  %v1594 = vadd.f32 %v1593, %v1525
  %v1595 = vadd.f32 %v1594, %v1529
  %v1596 = vrot.slane %v1595, 4
  %v1597 = vadd.f32 %v1595, %v1596
  %v1598 = vrot.slane %v1597, 2
  %v1599 = vadd.f32 %v1597, %v1598
  %v1600 = vrot.slane %v1599, 1
  %v1601 = vadd.f32 %v1599, %v1600
  %v1602 = vadd.f32 %v1566, %v1570
  %v1603 = vadd.f32 %v1602, %v1576
  %v1604 = vadd.f32 %v1603, %v1580
  %v1605 = vrot.slane %v1604, 4
  %v1606 = vadd.f32 %v1604, %v1605
  %v1607 = vrot.slane %v1606, 2
  %v1608 = vadd.f32 %v1606, %v1607
  %v1609 = vrot.slane %v1608, 1
  %v1610 = vadd.f32 %v1608, %v1609
  %v1611 = vadd.f32 %v1568, %v1572
  %v1612 = vadd.f32 %v1611, %v1578
  %v1613 = vadd.f32 %v1612, %v1582
  %v1614 = vrot.slane %v1613, 4
  %v1615 = vadd.f32 %v1613, %v1614
  %v1616 = vrot.slane %v1615, 2
  %v1617 = vadd.f32 %v1615, %v1616
  %v1618 = vrot.slane %v1617, 1
  %v1619 = vadd.f32 %v1617, %v1618
  %v1620 = vmul.f32 %v1513, %v1513
  %v1621 = vmul.f32 %v1515, %v1515
  %v1622 = vmul.f32 %v1566, %v1566
  %v1623 = vmul.f32 %v1568, %v1568
  %v1624 = vmul.f32 %v1517, %v1517
  %v1625 = vmul.f32 %v1519, %v1519
  %v1626 = vmul.f32 %v1570, %v1570
  %v1627 = vmul.f32 %v1572, %v1572
  %v1628 = vmul.f32 %v1523, %v1523
  %v1629 = vmul.f32 %v1525, %v1525
  %v1630 = vmul.f32 %v1576, %v1576
  %v1631 = vmul.f32 %v1578, %v1578
  %v1632 = vmul.f32 %v1527, %v1527
  %v1633 = vmul.f32 %v1529, %v1529
  %v1634 = vmul.f32 %v1580, %v1580
  %v1635 = vmul.f32 %v1582, %v1582
  %v1636 = vadd.f32 %v1620, %v1624
  %v1637 = vadd.f32 %v1636, %v1628
  %v1638 = vadd.f32 %v1637, %v1632
  %v1639 = vrot.slane %v1638, 4
  %v1640 = vadd.f32 %v1638, %v1639
  %v1641 = vrot.slane %v1640, 2
  %v1642 = vadd.f32 %v1640, %v1641
  %v1643 = vrot.slane %v1642, 1
  %v1644 = vadd.f32 %v1642, %v1643
  %v1645 = vadd.f32 %v1621, %v1625
  %v1646 = vadd.f32 %v1645, %v1629
  %v1647 = vadd.f32 %v1646, %v1633
  %v1648 = vrot.slane %v1647, 4
  %v1649 = vadd.f32 %v1647, %v1648
  %v1650 = vrot.slane %v1649, 2
  %v1651 = vadd.f32 %v1649, %v1650
  %v1652 = vrot.slane %v1651, 1
  %v1653 = vadd.f32 %v1651, %v1652
  %v1654 = vadd.f32 %v1622, %v1626
  %v1655 = vadd.f32 %v1654, %v1630
  %v1656 = vadd.f32 %v1655, %v1634
  %v1657 = vrot.slane %v1656, 4
  %v1658 = vadd.f32 %v1656, %v1657
  %v1659 = vrot.slane %v1658, 2
  %v1660 = vadd.f32 %v1658, %v1659
  %v1661 = vrot.slane %v1660, 1
  %v1662 = vadd.f32 %v1660, %v1661
  %v1663 = vadd.f32 %v1623, %v1627
  %v1664 = vadd.f32 %v1663, %v1631
  %v1665 = vadd.f32 %v1664, %v1635
  %v1666 = vrot.slane %v1665, 4
  %v1667 = vadd.f32 %v1665, %v1666
  %v1668 = vrot.slane %v1667, 2
  %v1669 = vadd.f32 %v1667, %v1668
  %v1670 = vrot.slane %v1669, 1
  %v1671 = vadd.f32 %v1669, %v1670
  %v1672 = vsel %vm478, %v1592, %v1644
  %v1673 = vsel %vm478, %v1601, %v1653
  %v1674 = vsel %vm478, %v1610, %v1662
  %v1675 = vsel %vm478, %v1619, %v1671
  %v1676 = vld [vmem:[%s8] sm:$0xff]
  %v1677 = vld [vmem:[%s8 + $0x8] sm:$0xff]
  %v1678 = vld [vmem:[%s8 + $0x10] sm:$0xff]
  %v1679 = vld [vmem:[%s8 + $0x18] sm:$0xff]
  %v1680 = vld [vmem:[%s8 + $0x20] sm:$0xff]
  %v1681 = vld [vmem:[%s8 + $0x28] sm:$0xff]
  %v1682 = vld [vmem:[%s8 + $0x30] sm:$0xff]
  %v1683 = vld [vmem:[%s8 + $0x38] sm:$0xff]
  %v1684 = vld [vmem:[%s8 + $0x40] sm:$0xff]
  %v1685 = vld [vmem:[%s8 + $0x48] sm:$0xff]
  %v1686 = vld [vmem:[%s8 + $0x50] sm:$0xff]
  %v1687 = vld [vmem:[%s8 + $0x58] sm:$0xff]
  %v1688 = vld [vmem:[%s8 + $0x60] sm:$0xff]
  %v1689 = vld [vmem:[%s8 + $0x68] sm:$0xff]
  %v1690 = vld [vmem:[%s8 + $0x70] sm:$0xff]
  %v1691 = vld [vmem:[%s8 + $0x78] sm:$0xff]
  %v1692 = vld [vmem:[%s8 + $0x80] sm:$0xff]
  %v1693 = vld [vmem:[%s8 + $0x88] sm:$0xff]
  %v1694 = vld [vmem:[%s8 + $0x90] sm:$0xff]
  %v1695 = vld [vmem:[%s8 + $0x98] sm:$0xff]
  %v1696 = vld [vmem:[%s8 + $0xa0] sm:$0xff]
  %v1697 = vld [vmem:[%s8 + $0xa8] sm:$0xff]
  %v1698 = vld [vmem:[%s8 + $0xb0] sm:$0xff]
  %v1699 = vld [vmem:[%s8 + $0xb8] sm:$0xff]
  %v1700 = vld [vmem:[%s8 + $0xc0] sm:$0xff]
  %v1701 = vld [vmem:[%s8 + $0xc8] sm:$0xff]
  %v1702 = vld [vmem:[%s8 + $0xd0] sm:$0xff]
  %v1703 = vld [vmem:[%s8 + $0xd8] sm:$0xff]
  %v1704 = vld [vmem:[%s8 + $0xe0] sm:$0xff]
  %v1705 = vld [vmem:[%s8 + $0xe8] sm:$0xff]
  %v1706 = vld [vmem:[%s8 + $0xf0] sm:$0xff]
  %v1707 = vld [vmem:[%s8 + $0xf8] sm:$0xff]
  %v1708 = vld [vmem:[%s8 + $0x100] sm:$0xff]
  %v1709 = vld [vmem:[%s8 + $0x108] sm:$0xff]
  %v1710 = vld [vmem:[%s8 + $0x110] sm:$0xff]
  %v1711 = vld [vmem:[%s8 + $0x118] sm:$0xff]
  %v1712 = vld [vmem:[%s8 + $0x120] sm:$0xff]
  %v1713 = vld [vmem:[%s8 + $0x128] sm:$0xff]
  %v1714 = vld [vmem:[%s8 + $0x130] sm:$0xff]
  %v1715 = vld [vmem:[%s8 + $0x138] sm:$0xff]
  %v1716 = vld [vmem:[%s8 + $0x140] sm:$0xff]
  %v1717 = vld [vmem:[%s8 + $0x148] sm:$0xff]
  %v1718 = vld [vmem:[%s8 + $0x150] sm:$0xff]
  %v1719 = vld [vmem:[%s8 + $0x158] sm:$0xff]
  %v1720 = vld [vmem:[%s8 + $0x160] sm:$0xff]
  %v1721 = vld [vmem:[%s8 + $0x168] sm:$0xff]
  %v1722 = vld [vmem:[%s8 + $0x170] sm:$0xff]
  %v1723 = vld [vmem:[%s8 + $0x178] sm:$0xff]
  %v1724 = vld [vmem:[%s8 + $0x180] sm:$0xff]
  %v1725 = vld [vmem:[%s8 + $0x188] sm:$0xff]
  %v1726 = vld [vmem:[%s8 + $0x190] sm:$0xff]
  %v1727 = vld [vmem:[%s8 + $0x198] sm:$0xff]
  %v1728 = vld [vmem:[%s8 + $0x1a0] sm:$0xff]
  %v1729 = vld [vmem:[%s8 + $0x1a8] sm:$0xff]
  %v1730 = vld [vmem:[%s8 + $0x1b0] sm:$0xff]
  %v1731 = vld [vmem:[%s8 + $0x1b8] sm:$0xff]
  %v1732 = vld [vmem:[%s8 + $0x1c0] sm:$0xff]
  %v1733 = vld [vmem:[%s8 + $0x1c8] sm:$0xff]
  %v1734 = vld [vmem:[%s8 + $0x1d0] sm:$0xff]
  %v1735 = vld [vmem:[%s8 + $0x1d8] sm:$0xff]
  %v1736 = vld [vmem:[%s8 + $0x1e0] sm:$0xff]
  %v1737 = vld [vmem:[%s8 + $0x1e8] sm:$0xff]
  %v1738 = vld [vmem:[%s8 + $0x1f0] sm:$0xff]
  %v1739 = vld [vmem:[%s8 + $0x1f8] sm:$0xff]
  %1740 = vmatprep.subr.mxu0 0.0
  %1741 = vmatpush1.msra.mxu0 %v1691
  %1742 = vmatprep.subr.mxu0 0.0
  %1743 = vmatpush1.msra.mxu0 %v1690
  %1744 = vmatprep.subr.mxu0 0.0
  %1745 = vmatpush1.msra.mxu0 %v1689
  %1746 = vmatprep.subr.mxu0 0.0
  %1747 = vmatpush1.msra.mxu0 %v1688
  %1748 = vmatprep.subr.mxu0 0.0
  %1749 = vmatpush1.msra.mxu0 %v1687
  %1750 = vmatprep.subr.mxu0 0.0
  %1751 = vmatpush1.msra.mxu0 %v1686
  %1752 = vmatprep.subr.mxu0 0.0
  %1753 = vmatpush1.msra.mxu0 %v1685
  %1754 = vmatprep.subr.mxu0 0.0
  %1755 = vmatpush1.msra.mxu0 %v1684
  %1756 = vmatprep.subr.mxu0 0.0
  %1757 = vmatpush1.msra.mxu0 %v1683
  %1758 = vmatprep.subr.mxu0 0.0
  %1759 = vmatpush1.msra.mxu0 %v1682
  %1760 = vmatprep.subr.mxu0 0.0
  %1761 = vmatpush1.msra.mxu0 %v1681
  %1762 = vmatprep.subr.mxu0 0.0
  %1763 = vmatpush1.msra.mxu0 %v1680
  %1764 = vmatprep.subr.mxu0 0.0
  %1765 = vmatpush1.msra.mxu0 %v1679
  %1766 = vmatprep.subr.mxu0 0.0
  %1767 = vmatpush1.msra.mxu0 %v1678
  %1768 = vmatprep.subr.mxu0 0.0
  %1769 = vmatpush1.msra.mxu0 %v1677
  %1770 = vmatprep.subr.mxu0 0.0
  %1771 = vmatpush1.msra.mxu0 %v1676
  %1772 = vmatprep.subr.mxu0 0.0
  %1773 = vmatpush2.msra.mxu0 %v1707
  %1774 = vmatprep.subr.mxu0 0.0
  %1775 = vmatpush2.msra.mxu0 %v1706
  %1776 = vmatprep.subr.mxu0 0.0
  %1777 = vmatpush2.msra.mxu0 %v1705
  %1778 = vmatprep.subr.mxu0 0.0
  %1779 = vmatpush2.msra.mxu0 %v1704
  %1780 = vmatprep.subr.mxu0 0.0
  %1781 = vmatpush2.msra.mxu0 %v1703
  %1782 = vmatprep.subr.mxu0 0.0
  %1783 = vmatpush2.msra.mxu0 %v1702
  %1784 = vmatprep.subr.mxu0 0.0
  %1785 = vmatpush2.msra.mxu0 %v1701
  %1786 = vmatprep.subr.mxu0 0.0
  %1787 = vmatpush2.msra.mxu0 %v1700
  %1788 = vmatprep.subr.mxu0 0.0
  %1789 = vmatpush2.msra.mxu0 %v1699
  %1790 = vmatprep.subr.mxu0 0.0
  %1791 = vmatpush2.msra.mxu0 %v1698
  %1792 = vmatprep.subr.mxu0 0.0
  %1793 = vmatpush2.msra.mxu0 %v1697
  %1794 = vmatprep.subr.mxu0 0.0
  %1795 = vmatpush2.msra.mxu0 %v1696
  %1796 = vmatprep.subr.mxu0 0.0
  %1797 = vmatpush2.msra.mxu0 %v1695
  %1798 = vmatprep.subr.mxu0 0.0
  %1799 = vmatpush2.msra.mxu0 %v1694
  %1800 = vmatprep.subr.mxu0 0.0
  %1801 = vmatpush2.msra.mxu0 %v1693
  %1802 = vmatprep.subr.mxu0 0.0
  %1803 = vmatpush2.msra.mxu0 %v1692
  %1804 = vmatprep.mubr.f32.mxu0 %v1673
  %1805 = vmatmul.mubr.f32.gmra.mxu0 %v1672
  %v1806 = vpop.f32.mrf.mxu0
  %v1807 = vadd.f32 0.0, %v1806
  %v1808 = vpop.f32.mrf.mxu0
  %1809 = vdwg.mxu0
  %1810 = vmatprep.subr.mxu0 0.0
  %1811 = vmatpush1.msra.mxu0 %v1723
  %1812 = vmatprep.subr.mxu0 0.0
  %1813 = vmatpush1.msra.mxu0 %v1722
  %1814 = vmatprep.subr.mxu0 0.0
  %1815 = vmatpush1.msra.mxu0 %v1721
  %1816 = vmatprep.subr.mxu0 0.0
  %1817 = vmatpush1.msra.mxu0 %v1720
  %1818 = vmatprep.subr.mxu0 0.0
  %1819 = vmatpush1.msra.mxu0 %v1719
  %1820 = vmatprep.subr.mxu0 0.0
  %1821 = vmatpush1.msra.mxu0 %v1718
  %1822 = vmatprep.subr.mxu0 0.0
  %1823 = vmatpush1.msra.mxu0 %v1717
  %1824 = vmatprep.subr.mxu0 0.0
  %1825 = vmatpush1.msra.mxu0 %v1716
  %1826 = vmatprep.subr.mxu0 0.0
  %1827 = vmatpush1.msra.mxu0 %v1715
  %1828 = vmatprep.subr.mxu0 0.0
  %1829 = vmatpush1.msra.mxu0 %v1714
  %1830 = vmatprep.subr.mxu0 0.0
  %1831 = vmatpush1.msra.mxu0 %v1713
  %1832 = vmatprep.subr.mxu0 0.0
  %1833 = vmatpush1.msra.mxu0 %v1712
  %1834 = vmatprep.subr.mxu0 0.0
  %1835 = vmatpush1.msra.mxu0 %v1711
  %1836 = vmatprep.subr.mxu0 0.0
  %1837 = vmatpush1.msra.mxu0 %v1710
  %1838 = vmatprep.subr.mxu0 0.0
  %1839 = vmatpush1.msra.mxu0 %v1709
  %1840 = vmatprep.subr.mxu0 0.0
  %1841 = vmatpush1.msra.mxu0 %v1708
  %1842 = vmatprep.subr.mxu0 0.0
  %1843 = vmatpush2.msra.mxu0 %v1739
  %1844 = vmatprep.subr.mxu0 0.0
  %1845 = vmatpush2.msra.mxu0 %v1738
  %1846 = vmatprep.subr.mxu0 0.0
  %1847 = vmatpush2.msra.mxu0 %v1737
  %1848 = vmatprep.subr.mxu0 0.0
  %1849 = vmatpush2.msra.mxu0 %v1736
  %1850 = vmatprep.subr.mxu0 0.0
  %1851 = vmatpush2.msra.mxu0 %v1735
  %1852 = vmatprep.subr.mxu0 0.0
  %1853 = vmatpush2.msra.mxu0 %v1734
  %1854 = vmatprep.subr.mxu0 0.0
  %1855 = vmatpush2.msra.mxu0 %v1733
  %1856 = vmatprep.subr.mxu0 0.0
  %1857 = vmatpush2.msra.mxu0 %v1732
  %1858 = vmatprep.subr.mxu0 0.0
  %1859 = vmatpush2.msra.mxu0 %v1731
  %1860 = vmatprep.subr.mxu0 0.0
  %1861 = vmatpush2.msra.mxu0 %v1730
  %1862 = vmatprep.subr.mxu0 0.0
  %1863 = vmatpush2.msra.mxu0 %v1729
  %1864 = vmatprep.subr.mxu0 0.0
  %1865 = vmatpush2.msra.mxu0 %v1728
  %1866 = vmatprep.subr.mxu0 0.0
  %1867 = vmatpush2.msra.mxu0 %v1727
  %1868 = vmatprep.subr.mxu0 0.0
  %1869 = vmatpush2.msra.mxu0 %v1726
  %1870 = vmatprep.subr.mxu0 0.0
  %1871 = vmatpush2.msra.mxu0 %v1725
  %1872 = vmatprep.subr.mxu0 0.0
  %1873 = vmatpush2.msra.mxu0 %v1724
  %1874 = vmatprep.mubr.f32.mxu0 %v1675
  %1875 = vmatmul.mubr.f32.gmra.mxu0 %v1674
  %v1876 = vpop.f32.mrf.mxu0
  %v1877 = vadd.f32 %v1807, %v1876
  %v1878 = vpop.f32.mrf.mxu0
  %1879 = vdwg.mxu0
  %v1880 = vld [vmem:[%s9] sm:$0xff]
  %v1881 = vld [vmem:[%s9 + $0x8] sm:$0xff]
  %v1882 = vld [vmem:[%s9 + $0x10] sm:$0xff]
  %v1883 = vld [vmem:[%s9 + $0x18] sm:$0xff]
  %v1884 = vld [vmem:[%s9 + $0x20] sm:$0xff]
  %v1885 = vld [vmem:[%s9 + $0x28] sm:$0xff]
  %v1886 = vld [vmem:[%s9 + $0x30] sm:$0xff]
  %v1887 = vld [vmem:[%s9 + $0x38] sm:$0xff]
  %v1888 = vld [vmem:[%s9 + $0x40] sm:$0xff]
  %v1889 = vld [vmem:[%s9 + $0x48] sm:$0xff]
  %v1890 = vld [vmem:[%s9 + $0x50] sm:$0xff]
  %v1891 = vld [vmem:[%s9 + $0x58] sm:$0xff]
  %v1892 = vld [vmem:[%s9 + $0x60] sm:$0xff]
  %v1893 = vld [vmem:[%s9 + $0x68] sm:$0xff]
  %v1894 = vld [vmem:[%s9 + $0x70] sm:$0xff]
  %v1895 = vld [vmem:[%s9 + $0x78] sm:$0xff]
  %vm1896 = vcmask 261120
  %v1898 = vsel %vm1896, %v1877, 0
  %1900 = vmatprep.subr.mxu0 0.0
  %1901 = vmatpush1.msra.mxu0 0.0
  %1902 = vmatprep.subr.mxu0 0.0
  %1903 = vmatpush1.msra.mxu0 0.0
  %1904 = vmatprep.subr.mxu0 0.0
  %1905 = vmatpush1.msra.mxu0 0.0
  %1906 = vmatprep.subr.mxu0 0.0
  %1907 = vmatpush1.msra.mxu0 0.0
  %1908 = vmatprep.subr.mxu0 0.0
  %1909 = vmatpush1.msra.mxu0 0.0
  %1910 = vmatprep.subr.mxu0 0.0
  %1911 = vmatpush1.msra.mxu0 0.0
  %1912 = vmatprep.subr.mxu0 0.0
  %1913 = vmatpush1.msra.mxu0 0.0
  %1914 = vmatprep.subr.mxu0 0.0
  %1915 = vmatpush1.msra.mxu0 0.0
  %1916 = vmatprep.subr.mxu0 0.0
  %1917 = vmatpush1.msra.mxu0 0.0
  %1918 = vmatprep.subr.mxu0 0.0
  %1919 = vmatpush1.msra.mxu0 0.0
  %1920 = vmatprep.subr.mxu0 0.0
  %1921 = vmatpush1.msra.mxu0 0.0
  %1922 = vmatprep.subr.mxu0 0.0
  %1923 = vmatpush1.msra.mxu0 0.0
  %1924 = vmatprep.subr.mxu0 %v1893
  %1925 = vmatpush1.msra.mxu0 %v1892
  %1926 = vmatprep.subr.mxu0 %v1889
  %1927 = vmatpush1.msra.mxu0 %v1888
  %1928 = vmatprep.subr.mxu0 %v1885
  %1929 = vmatpush1.msra.mxu0 %v1884
  %1930 = vmatprep.subr.mxu0 %v1881
  %1931 = vmatpush1.msra.mxu0 %v1880
  %1932 = vmatprep.subr.mxu0 0.0
  %1933 = vmatpush2.msra.mxu0 0.0
  %1934 = vmatprep.subr.mxu0 0.0
  %1935 = vmatpush2.msra.mxu0 0.0
  %1936 = vmatprep.subr.mxu0 0.0
  %1937 = vmatpush2.msra.mxu0 0.0
  %1938 = vmatprep.subr.mxu0 0.0
  %1939 = vmatpush2.msra.mxu0 0.0
  %1940 = vmatprep.subr.mxu0 0.0
  %1941 = vmatpush2.msra.mxu0 0.0
  %1942 = vmatprep.subr.mxu0 0.0
  %1943 = vmatpush2.msra.mxu0 0.0
  %1944 = vmatprep.subr.mxu0 0.0
  %1945 = vmatpush2.msra.mxu0 0.0
  %1946 = vmatprep.subr.mxu0 0.0
  %1947 = vmatpush2.msra.mxu0 0.0
  %1948 = vmatprep.subr.mxu0 0.0
  %1949 = vmatpush2.msra.mxu0 0.0
  %1950 = vmatprep.subr.mxu0 0.0
  %1951 = vmatpush2.msra.mxu0 0.0
  %1952 = vmatprep.subr.mxu0 0.0
  %1953 = vmatpush2.msra.mxu0 0.0
  %1954 = vmatprep.subr.mxu0 0.0
  %1955 = vmatpush2.msra.mxu0 0.0
  %1956 = vmatprep.subr.mxu0 0.0
  %1957 = vmatpush2.msra.mxu0 0.0
  %1958 = vmatprep.subr.mxu0 0.0
  %1959 = vmatpush2.msra.mxu0 0.0
  %1960 = vmatprep.subr.mxu0 0.0
  %1961 = vmatpush2.msra.mxu0 0.0
  %1962 = vmatprep.subr.mxu0 0.0
  %1963 = vmatpush2.msra.mxu0 0.0
  %1964 = vmatprep.mubr.f32.mxu0 0.0
  %1965 = vmatmul.mubr.f32.gmra.mxu0 %v1898
  %v1966 = vpop.f32.mrf.mxu0
  %v1967 = vadd.f32 0.0, %v1966
  %v1968 = vpop.f32.mrf.mxu0
  %v1969 = vadd.f32 0.0, %v1968
  %1970 = vdwg.mxu0
  %1971 = vmatprep.subr.mxu0 0.0
  %1972 = vmatpush1.msra.mxu0 0.0
  %1973 = vmatprep.subr.mxu0 0.0
  %1974 = vmatpush1.msra.mxu0 0.0
  %1975 = vmatprep.subr.mxu0 0.0
  %1976 = vmatpush1.msra.mxu0 0.0
  %1977 = vmatprep.subr.mxu0 0.0
  %1978 = vmatpush1.msra.mxu0 0.0
  %1979 = vmatprep.subr.mxu0 0.0
  %1980 = vmatpush1.msra.mxu0 0.0
  %1981 = vmatprep.subr.mxu0 0.0
  %1982 = vmatpush1.msra.mxu0 0.0
  %1983 = vmatprep.subr.mxu0 0.0
  %1984 = vmatpush1.msra.mxu0 0.0
  %1985 = vmatprep.subr.mxu0 0.0
  %1986 = vmatpush1.msra.mxu0 0.0
  %1987 = vmatprep.subr.mxu0 0.0
  %1988 = vmatpush1.msra.mxu0 0.0
  %1989 = vmatprep.subr.mxu0 0.0
  %1990 = vmatpush1.msra.mxu0 0.0
  %1991 = vmatprep.subr.mxu0 0.0
  %1992 = vmatpush1.msra.mxu0 0.0
  %1993 = vmatprep.subr.mxu0 0.0
  %1994 = vmatpush1.msra.mxu0 0.0
  %1995 = vmatprep.subr.mxu0 %v1895
  %1996 = vmatpush1.msra.mxu0 %v1894
  %1997 = vmatprep.subr.mxu0 %v1891
  %1998 = vmatpush1.msra.mxu0 %v1890
  %1999 = vmatprep.subr.mxu0 %v1887
  %2000 = vmatpush1.msra.mxu0 %v1886
  %2001 = vmatprep.subr.mxu0 %v1883
  %2002 = vmatpush1.msra.mxu0 %v1882
  %2003 = vmatprep.subr.mxu0 0.0
  %2004 = vmatpush2.msra.mxu0 0.0
  %2005 = vmatprep.subr.mxu0 0.0
  %2006 = vmatpush2.msra.mxu0 0.0
  %2007 = vmatprep.subr.mxu0 0.0
  %2008 = vmatpush2.msra.mxu0 0.0
  %2009 = vmatprep.subr.mxu0 0.0
  %2010 = vmatpush2.msra.mxu0 0.0
  %2011 = vmatprep.subr.mxu0 0.0
  %2012 = vmatpush2.msra.mxu0 0.0
  %2013 = vmatprep.subr.mxu0 0.0
  %2014 = vmatpush2.msra.mxu0 0.0
  %2015 = vmatprep.subr.mxu0 0.0
  %2016 = vmatpush2.msra.mxu0 0.0
  %2017 = vmatprep.subr.mxu0 0.0
  %2018 = vmatpush2.msra.mxu0 0.0
  %2019 = vmatprep.subr.mxu0 0.0
  %2020 = vmatpush2.msra.mxu0 0.0
  %2021 = vmatprep.subr.mxu0 0.0
  %2022 = vmatpush2.msra.mxu0 0.0
  %2023 = vmatprep.subr.mxu0 0.0
  %2024 = vmatpush2.msra.mxu0 0.0
  %2025 = vmatprep.subr.mxu0 0.0
  %2026 = vmatpush2.msra.mxu0 0.0
  %2027 = vmatprep.subr.mxu0 0.0
  %2028 = vmatpush2.msra.mxu0 0.0
  %2029 = vmatprep.subr.mxu0 0.0
  %2030 = vmatpush2.msra.mxu0 0.0
  %2031 = vmatprep.subr.mxu0 0.0
  %2032 = vmatpush2.msra.mxu0 0.0
  %2033 = vmatprep.subr.mxu0 0.0
  %2034 = vmatpush2.msra.mxu0 0.0
  %2035 = vmatprep.mubr.f32.mxu0 0.0
  %2036 = vmatmul.mubr.f32.gmra.mxu0 %v1898
  %v2037 = vpop.f32.mrf.mxu0
  %v2038 = vadd.f32 0.0, %v2037
  %v2039 = vpop.f32.mrf.mxu0
  %v2040 = vadd.f32 0.0, %v2039
  %2041 = vdwg.mxu0
  %v2042 = vmul.f32 %v1967, 0.001953125
  %v2043 = vmul.f32 %v1969, 0.001953125
  %v2044 = vmul.f32 %v2038, 0.001953125
  %v2045 = vmul.f32 %v2040, 0.001953125
  %v2046 = vmul.f32 %v2042, %v2042
  %v2047 = vmul.f32 %v2043, %v2043
  %v2048 = vmul.f32 %v2044, %v2044
  %v2049 = vmul.f32 %v2045, %v2045
  %v2054 = vrot.slane %v2046, 7
  %v2055 = vrot.slane %v2047, 7
  %v2056 = vrot.slane %v2048, 7
  %v2057 = vrot.slane %v2049, 7
  %v2062 = vsub.f32 %v2042, %v2054
  %v2063 = vsub.f32 %v2043, %v2055
  %v2064 = vsub.f32 %v2044, %v2056
  %v2065 = vsub.f32 %v2045, %v2057
  %v2066 = vld [vmem:[%s14] sm:$0xf]
  %v2067 = vadd.f32 %v2062, 1e-05
  %v2068 = vadd.f32 %v2063, 1e-05
  %v2069 = vadd.f32 %v2064, 1e-05
  %v2070 = vadd.f32 %v2065, 1e-05
  %v2071 = vrsqrt.pop %v2067
  %v2072 = vrsqrt.pop %v2068
  %v2073 = vrsqrt.pop %v2069
  %v2074 = vrsqrt.pop %v2070
  %v2079 = vcombine.low %v2071, %v2072
  %v2080 = vcombine.low %v2073, %v2074
  %v2082 = vunpack.c.l.s4 1966171168
  %v2083 = vunpack.c.0.s8 %v2082
  %v2084 = vlaneseq
  %v2085 = vshrl.u32 %v2084, 7
  %v2086 = vsub.s32 %v2083, %v2085
  %v2087 = vrot.slane %v2079, %v2086
  %v2089 = vunpack.c.l.s4 1966171168
  %v2090 = vunpack.c.0.s8 %v2089
  %v2091 = vlaneseq
  %v2092 = vshrl.u32 %v2091, 7
  %v2093 = vsub.s32 %v2090, %v2092
  %v2094 = vrot.slane %v2080, %v2093
  %v2095 = vcombine.high %v2087, %v2094
  %v2097 = vunpack.c.l.s4 1966171168
  %v2098 = vunpack.c.0.s8 %v2097
  %v2099 = vlaneseq
  %v2100 = vshrl.u32 %v2099, 7
  %v2101 = vsub.s32 %v2098, %v2100
  %v2102 = vrot.slane %v2095, %v2101
  %v2104 = vmul.f32 %v2066, %v2102
  %v2106 = vlaneseq
  %v2107 = vshrl.u32 %v2106, 7
  %v2108 = vsub.s32 0, %v2107
  %v2109 = vrot.slane %v2104, %v2108
  %v2110 = vlaneseq
  %v2111 = vshrl.u32 %v2110, 7
  %v2112 = vsub.s32 1, %v2111
  %v2113 = vrot.slane %v2104, %v2112
  %v2114 = vlaneseq
  %v2115 = vshrl.u32 %v2114, 7
  %v2116 = vsub.s32 2, %v2115
  %v2117 = vrot.slane %v2104, %v2116
  %v2118 = vlaneseq
  %v2119 = vshrl.u32 %v2118, 7
  %v2120 = vsub.s32 3, %v2119
  %v2121 = vrot.slane %v2104, %v2120
  %v2126 = vmul.f32 %v1513, %v2109
  %v2127 = vmul.f32 %v1515, %v2113
  %v2128 = vmul.f32 %v1566, %v2117
  %v2129 = vmul.f32 %v1568, %v2121
  %v2130 = vmul.f32 %v1517, %v2109
  %v2131 = vmul.f32 %v1519, %v2113
  %v2132 = vmul.f32 %v1570, %v2117
  %v2133 = vmul.f32 %v1572, %v2121
  %v2134 = vmul.f32 %v1523, %v2109
  %v2135 = vmul.f32 %v1525, %v2113
  %v2136 = vmul.f32 %v1576, %v2117
  %v2137 = vmul.f32 %v1578, %v2121
  %v2138 = vmul.f32 %v1527, %v2109
  %v2139 = vmul.f32 %v1529, %v2113
  %v2140 = vmul.f32 %v1580, %v2117
  %v2141 = vmul.f32 %v1582, %v2121
  %v2142 = vld [vmem:[%s15] sm:$0xf]
  %v2143 = vmul.f32 %v2042, %v2109
  %v2144 = vmul.f32 %v2043, %v2113
  %v2145 = vmul.f32 %v2044, %v2117
  %v2146 = vmul.f32 %v2045, %v2121
  %v2151 = vcombine.low %v2143, %v2144
  %v2152 = vcombine.low %v2145, %v2146
  %v2154 = vunpack.c.l.s4 1966171168
  %v2155 = vunpack.c.0.s8 %v2154
  %v2156 = vlaneseq
  %v2157 = vshrl.u32 %v2156, 7
  %v2158 = vsub.s32 %v2155, %v2157
  %v2159 = vrot.slane %v2151, %v2158
  %v2161 = vunpack.c.l.s4 1966171168
  %v2162 = vunpack.c.0.s8 %v2161
  %v2163 = vlaneseq
  %v2164 = vshrl.u32 %v2163, 7
  %v2165 = vsub.s32 %v2162, %v2164
  %v2166 = vrot.slane %v2152, %v2165
  %v2167 = vcombine.low %v2159, %v2166
  %v2169 = vunpack.c.l.s4 1966171168
  %v2170 = vunpack.c.0.s8 %v2169
  %v2171 = vlaneseq
  %v2172 = vshrl.u32 %v2171, 7
  %v2173 = vsub.s32 %v2170, %v2172
  %v2174 = vrot.slane %v2167, %v2173
  %v2176 = vsub.f32 %v2142, %v2174
  %v2178 = vlaneseq
  %v2179 = vshrl.u32 %v2178, 7
  %v2180 = vsub.s32 0, %v2179
  %v2181 = vrot.slane %v2176, %v2180
  %v2182 = vlaneseq
  %v2183 = vshrl.u32 %v2182, 7
  %v2184 = vsub.s32 1, %v2183
  %v2185 = vrot.slane %v2176, %v2184
  %v2186 = vlaneseq
  %v2187 = vshrl.u32 %v2186, 7
  %v2188 = vsub.s32 2, %v2187
  %v2189 = vrot.slane %v2176, %v2188
  %v2190 = vlaneseq
  %v2191 = vshrl.u32 %v2190, 7
  %v2192 = vsub.s32 3, %v2191
  %v2193 = vrot.slane %v2176, %v2192
  %v2198 = vadd.f32 %v2126, %v2181
  %v2199 = vadd.f32 %v2127, %v2185
  %v2200 = vadd.f32 %v2128, %v2189
  %v2201 = vadd.f32 %v2129, %v2193
  %v2202 = vadd.f32 %v2130, %v2181
  %v2203 = vadd.f32 %v2131, %v2185
  %v2204 = vadd.f32 %v2132, %v2189
  %v2205 = vadd.f32 %v2133, %v2193
  %v2206 = vadd.f32 %v2134, %v2181
  %v2207 = vadd.f32 %v2135, %v2185
  %v2208 = vadd.f32 %v2136, %v2189
  %v2209 = vadd.f32 %v2137, %v2193
  %v2210 = vadd.f32 %v2138, %v2181
  %v2211 = vadd.f32 %v2139, %v2185
  %v2212 = vadd.f32 %v2140, %v2189
  %v2213 = vadd.f32 %v2141, %v2193
  %2214 = vst [vmem:[%s16] sm:$0xff] %v2198
  %2215 = vst [vmem:[%s16 + $0x8] sm:$0xff] %v2199
  %2216 = vst [vmem:[%s16 + $0x10] sm:$0xff] %v2200
  %2217 = vst [vmem:[%s16 + $0x18] sm:$0xff] %v2201
  %2218 = vst [vmem:[%s16 + $0x20] sm:$0xff] %v2202
  %2219 = vst [vmem:[%s16 + $0x28] sm:$0xff] %v2203
  %2220 = vst [vmem:[%s16 + $0x30] sm:$0xff] %v2204
  %2221 = vst [vmem:[%s16 + $0x38] sm:$0xff] %v2205
  %2222 = vst [vmem:[%s16 + $0x40] sm:$0xff] %v2206
  %2223 = vst [vmem:[%s16 + $0x48] sm:$0xff] %v2207
  %2224 = vst [vmem:[%s16 + $0x50] sm:$0xff] %v2208
  %2225 = vst [vmem:[%s16 + $0x58] sm:$0xff] %v2209
  %2226 = vst [vmem:[%s16 + $0x60] sm:$0xff] %v2210
  %2227 = vst [vmem:[%s16 + $0x68] sm:$0xff] %v2211
  %2228 = vst [vmem:[%s16 + $0x70] sm:$0xff] %v2212
  %2229 = vst [vmem:[%s16 + $0x78] sm:$0xff] %v2213
  // Predicated region
  $region66: #{bypass_forward.1} parent=0 // pred_check
    _
  $region67: #{bypass_forward.1} parent=0 // pred_check_branch
    %2231 = sbr.rel (0) target = $region69
  $region68: #{bypass_forward.1} parent=0 // pred_region
    _
  $region69: #{bypass_forward.1} parent=0 // pred_fallthru
    _
  // Predicated region
  $region70: #{bypass_forward.1} parent=0 // pred_check
    _
  $region71: #{bypass_forward.1} parent=0 // pred_check_branch
    %2233 = sbr.rel (0) target = $region73
  $region72: #{bypass_forward.1} parent=0 // pred_region
    _
  $region73: #{bypass_forward.1} parent=0 // pred_fallthru
    _

</llo_original>
